<compile_context>
chip_gen: v5e
topology: v5e:2x2
jax: 0.10.0
libtpu: 0.0.40
codegen_flags: <defaults>
</compile_context>

<pallas_src>
import jax
import jax.numpy as jnp
from jax.experimental import pallas as pl
from jax.experimental.pallas import tpu as pltpu

BN_EPS = 1e-5
_VMEM_LIMIT_BYTES = 32 * 1024 * 1024  # well above actual use; safe on v5e/v6e/v7x


def _round_up(x: int, m: int) -> int:
    return (x + m - 1) // m * m


def _cdiv(a: int, b: int) -> int:
    return (a + b - 1) // b


def _pick_hw_tile(hw: int, c: int, itemsize: int, batch: int,
                  target_bytes: int = 2 * 1024 * 1024,
                  max_lanes: int = 8192) -> int:
    """Spatial tile (lane axis): ~2 MiB per (C, t_hw) streaming buffer,
    multiple of 128 lanes, capped, and adjusted so the 'parallel' grid has
    >= 2 programs (v7x megacore) whenever possible."""
    hw128 = _round_up(hw, 128)
    cap = max(128, (target_bytes // max(1, c * itemsize)) // 128 * 128)
    t = min(cap, max_lanes, hw128)
    if batch * _cdiv(hw128, t) < 2 and hw128 > 128:
        t = _round_up(_cdiv(hw128, 2), 128)
    return t


# ---------------- kernels (all channel-major, no masks) ----------------

def _conv1_stats_kernel(x_ref, w1t_ref, h1_ref, st_ref):
    """h1 = W1^T @ x_blk ; per-tile sum / sum-of-squares per channel.

    x_ref: (C, t) ; w1t_ref: (mid, C) ; h1_ref: (mid, t) ; st_ref: (mid, 2).
    Zero-padded spatial columns contribute exactly 0 (no bias inside kernel).
    """
    h1 = jnp.dot(w1t_ref[...], x_ref[...], preferred_element_type=jnp.float32)
    h1_ref[...] = h1.astype(h1_ref.dtype)
    s = jnp.sum(h1, axis=1, keepdims=True)          # (mid, 1)
    q = jnp.sum(h1 * h1, axis=1, keepdims=True)     # (mid, 1)
    st_ref[...] = jnp.concatenate([s, q], axis=1)   # (mid, 2)


def _bn1_relu_gram_kernel(h1_ref, s1_ref, t1_ref, st_ref):
    """a = relu(h1*s1 + t1); emit sum(a) and Gram a a^T only (no h2 write).

    h1_ref: (mid, t) ; s1_ref/t1_ref: (mid, 1) ; st_ref: (mid, mid+1).
    """
    a = jnp.maximum(h1_ref[...].astype(jnp.float32) * s1_ref[...] + t1_ref[...],
                    0.0)
    gram = jax.lax.dot_general(a, a, (((1,), (1,)), ((), ())),
                               preferred_element_type=jnp.float32)  # (mid, mid)
    sum_a = jnp.sum(a, axis=1, keepdims=True)                       # (mid, 1)
    st_ref[...] = jnp.concatenate([sum_a, gram], axis=1)


def _recompute_bn2_kernel(h1_ref, s1_ref, t1_ref, w2t_ref, s2_ref, t2_ref,
                          o_ref):
    """Recompute a and h2 = W2^T @ a, apply BN2 affine, write NCHW block.

    h1_ref: (mid, t) ; w2t_ref: (C, mid) ; s2/t2: (C, 1) ; o_ref: (C, t).
    """
    a = jnp.maximum(h1_ref[...].astype(jnp.float32) * s1_ref[...] + t1_ref[...],
                    0.0)
    h2 = jnp.dot(w2t_ref[...], a, preferred_element_type=jnp.float32)
    o_ref[...] = (h2 * s2_ref[...] + t2_ref[...]).astype(o_ref.dtype)


# ---------------- wrapper ----------------

def local_attention_forward(x, w1, b1, gamma1, beta1, w2, b2, gamma2, beta2,
                            eps=BN_EPS):
    """x: (B, C, H, W); w1: (C, mid); w2: (mid, C).  Returns (B, C, H, W).

    b1/b2 are accepted for interface parity but are exact no-ops because each
    1x1 conv is immediately followed by batch-statistics BatchNorm.
    """
    del b1, b2
    B, C, H, W = x.shape
    mid = w1.shape[1]
    HW = H * W
    rows = B * HW

    xc = x.reshape(B, C, HW)                     # free: NCHW is channel-major
    t_hw = _pick_hw_tile(HW, C, x.dtype.itemsize, B)
    HWp = _round_up(HW, t_hw)
    if HWp != HW:
        xc = jnp.pad(xc, ((0, 0), (0, 0), (0, HWp - HW)))
    n_hw = HWp // t_hw

    w1t = jnp.transpose(w1).astype(jnp.float32)  # (mid, C)  tiny constant
    w2f = w2.astype(jnp.float32)                 # (mid, C)
    w2t = jnp.transpose(w2f)                     # (C, mid)
    g1 = gamma1.astype(jnp.float32)
    bt1 = beta1.astype(jnp.float32)
    g2 = gamma2.astype(jnp.float32)
    bt2 = beta2.astype(jnp.float32)

    cparams = pltpu.CompilerParams(
        dimension_semantics=("parallel", "parallel"),
        vmem_limit_bytes=_VMEM_LIMIT_BYTES,
    )

    # -------- pass A: conv1 (channel-major matmul) + BN1 partial stats ------
    h1, st1 = pl.pallas_call(
        _conv1_stats_kernel,
        out_shape=(jax.ShapeDtypeStruct((B, mid, HWp), jnp.float32),
                   jax.ShapeDtypeStruct((B, n_hw, mid, 2), jnp.float32)),
        grid_spec=pltpu.PrefetchScalarGridSpec(
            num_scalar_prefetch=0,
            grid=(B, n_hw),
            in_specs=[pl.BlockSpec((None, C, t_hw), lambda b, t: (b, 0, t)),
                      pl.BlockSpec((mid, C), lambda b, t: (0, 0))],
            out_specs=(pl.BlockSpec((None, mid, t_hw), lambda b, t: (b, 0, t)),
                       pl.BlockSpec((None, None, mid, 2),
                                    lambda b, t: (b, t, 0, 0)))),
        compiler_params=cparams,
    )(xc, w1t)

    sum1 = jnp.sum(st1[..., 0], axis=(0, 1))                  # (mid,)
    sq1 = jnp.sum(st1[..., 1], axis=(0, 1))                   # (mid,)
    mean1 = sum1 / rows
    var1 = jnp.maximum(sq1 / rows - mean1 * mean1, 0.0)
    inv1 = jax.lax.rsqrt(var1 + eps)
    scale1 = g1 * inv1
    shift1 = bt1 - mean1 * scale1
    scale1_c = scale1.reshape(mid, 1)
    shift1_c = shift1.reshape(mid, 1)

    # -------- pass B: BN1 + ReLU, emit sum(a) and mid x mid Gram only -------
    st2 = pl.pallas_call(
        _bn1_relu_gram_kernel,
        out_shape=jax.ShapeDtypeStruct((B, n_hw, mid, mid + 1), jnp.float32),
        grid_spec=pltpu.PrefetchScalarGridSpec(
            num_scalar_prefetch=0,
            grid=(B, n_hw),
            in_specs=[pl.BlockSpec((None, mid, t_hw), lambda b, t: (b, 0, t)),
                      pl.BlockSpec((mid, 1), lambda b, t: (0, 0)),
                      pl.BlockSpec((mid, 1), lambda b, t: (0, 0))],
            out_specs=pl.BlockSpec((None, None, mid, mid + 1),
                                   lambda b, t: (b, t, 0, 0))),
        compiler_params=cparams,
    )(h1, scale1_c, shift1_c)

    sum_a = jnp.sum(st2[..., 0], axis=(0, 1))                 # (mid,)
    gram = jnp.sum(st2[..., 1:], axis=(0, 1))                 # (mid, mid)
    if HWp != HW:
        # Zero-padded spatial columns have h1 == 0, so each contributes
        # relu(shift1) to sum(a) and its outer product to the Gram.
        n_pad = B * (HWp - HW)
        a_pad = jnp.maximum(shift1, 0.0)
        sum_a = sum_a - n_pad * a_pad
        gram = gram - n_pad * jnp.outer(a_pad, a_pad)

    # BN2 stats from the Gram:  mean2 = E[a] @ W2 ; E[h2^2] = diag(W2^T G W2)/N
    mean2 = (sum_a / rows) @ w2f                               # (C,)
    sq2 = jnp.einsum('mc,mn,nc->c', w2f, gram, w2f) / rows     # (C,)
    var2 = jnp.maximum(sq2 - mean2 * mean2, 0.0)
    inv2 = jax.lax.rsqrt(var2 + eps)
    scale2 = g2 * inv2
    shift2 = bt2 - mean2 * scale2
    scale2_c = scale2.reshape(C, 1)
    shift2_c = shift2.reshape(C, 1)

    # -------- pass C: recompute a, h2 = W2^T @ a, BN2 affine, write NCHW ----
    outc = pl.pallas_call(
        _recompute_bn2_kernel,
        out_shape=jax.ShapeDtypeStruct((B, C, HWp), x.dtype),
        grid_spec=pltpu.PrefetchScalarGridSpec(
            num_scalar_prefetch=0,
            grid=(B, n_hw),
            in_specs=[pl.BlockSpec((None, mid, t_hw), lambda b, t: (b, 0, t)),
                      pl.BlockSpec((mid, 1), lambda b, t: (0, 0)),
                      pl.BlockSpec((mid, 1), lambda b, t: (0, 0)),
                      pl.BlockSpec((C, mid), lambda b, t: (0, 0)),
                      pl.BlockSpec((C, 1), lambda b, t: (0, 0)),
                      pl.BlockSpec((C, 1), lambda b, t: (0, 0))],
            out_specs=pl.BlockSpec((None, C, t_hw), lambda b, t: (b, 0, t))),
        compiler_params=cparams,
    )(h1, scale1_c, shift1_c, w2t, scale2_c, shift2_c)

    if HWp != HW:
        outc = outc[:, :, :HW]
    return outc.reshape(B, C, H, W)


# Pure-jnp reference (same math as the PyTorch module with batch-stat BN).
def _reference(x, w1, b1, gamma1, beta1, w2, b2, gamma2, beta2, eps=BN_EPS):
    B, C, H, W = x.shape
    x2 = jnp.transpose(x, (0, 2, 3, 1)).reshape(-1, C)
    h1 = x2 @ w1 + b1.reshape(1, -1)
    m1, v1 = h1.mean(axis=0), h1.var(axis=0)
    a = jnp.maximum((h1 - m1) * jax.lax.rsqrt(v1 + eps) * gamma1 + beta1, 0.0)
    h2 = a @ w2 + b2.reshape(1, -1)
    m2, v2 = h2.mean(axis=0), h2.var(axis=0)
    o = (h2 - m2) * jax.lax.rsqrt(v2 + eps) * gamma2 + beta2
    return jnp.transpose(o.reshape(B, H, W, C), (0, 3, 1, 2))


if __name__ == "__main__":
    # Small shapes consistent with the module (in_channels >= reduction).
    B, C, H, W = 2, 128, 16, 16
    reduction = 16
    mid = C // reduction

    key = jax.random.PRNGKey(0)
    k = jax.random.split(key, 5)

    # Conv 1x1 weights as matmul matrices (torch weight[o,i,1,1] -> (i, o)).
    # kaiming_normal(fan_out, relu): std = sqrt(2 / out_channels).
    w1 = jax.random.normal(k[0], (C, mid), jnp.float32) * (2.0 / mid) ** 0.5
    b1 = (jax.random.uniform(k[1], (mid,), jnp.float32, -1.0, 1.0)
          * (1.0 / C) ** 0.5)
    w2 = jax.random.normal(k[2], (mid, C), jnp.float32) * (2.0 / C) ** 0.5
    b2 = (jax.random.uniform(k[3], (C,), jnp.float32, -1.0, 1.0)
          * (1.0 / mid) ** 0.5)
    gamma1 = jnp.ones((mid,), jnp.float32)
    beta1 = jnp.zeros((mid,), jnp.float32)
    gamma2 = jnp.ones((C,), jnp.float32)
    beta2 = jnp.zeros((C,), jnp.float32)

    x = jax.random.normal(k[4], (B, C, H, W), jnp.float32)

    fwd = jax.jit(local_attention_forward)
    out = jax.block_until_ready(
        fwd(x, w1, b1, gamma1, beta1, w2, b2, gamma2, beta2))

    ref = _reference(x, w1, b1, gamma1, beta1, w2, b2, gamma2, beta2)
    assert out.shape == ref.shape and out.dtype == ref.dtype
    max_err = float(jnp.max(jnp.abs(out - ref)))
    assert jnp.allclose(out, ref, atol=1e-3, rtol=1e-3), max_err

    print("KERNEL_OK")
</pallas_src>

<mosaic_0001>
module attributes {stable_mosaic.version = 11 : i64} {
  func.func @_conv1_stats_kernel(%arg0: i32, %arg1: i32, %arg2: memref<1x128x256xf32, #tpu.memory_space<vmem>>, %arg3: memref<8x128xf32, #tpu.memory_space<vmem>>, %arg4: memref<1x8x256xf32, #tpu.memory_space<vmem>>, %arg5: memref<1x1x8x2xf32, #tpu.memory_space<vmem>>) attributes {dimension_semantics = [#tpu.dimension_semantics<parallel>, #tpu.dimension_semantics<parallel>], iteration_bounds = array<i64: 2, 1>, scalar_prefetch = 0 : i64, scratch_operands = 0 : i64, tpu.core_type = #tpu.core_type<tc>, window_params = [{transform_indices = @transform_0, window_bounds = array<i64: 1, 128, 256>}, {pipeline_mode = #tpu.pipeline_mode<synchronous>, transform_indices = @transform_1, window_bounds = array<i64: 8, 128>}, {transform_indices = @transform_2, window_bounds = array<i64: 1, 8, 256>}, {transform_indices = @transform_3, window_bounds = array<i64: 1, 1, 8, 2>}]} {
    %c0 = arith.constant 0 : index
    %c0_0 = arith.constant 0 : index
    %0 = vector.load %arg3[%c0, %c0_0] : memref<8x128xf32, #tpu.memory_space<vmem>>, vector<8x128xf32>
    %c0_1 = arith.constant 0 : index
    %c0_2 = arith.constant 0 : index
    %c0_3 = arith.constant 0 : index
    %1 = vector.load %arg2[%c0_1, %c0_2, %c0_3] : memref<1x128x256xf32, #tpu.memory_space<vmem>>, vector<1x128x256xf32>
    %2 = vector.shape_cast %1 : vector<1x128x256xf32> to vector<128x256xf32>
    %cst = arith.constant dense<0.000000e+00> : vector<8x256xf32>
    %3 = tpu.matmul %0, %2, %cst {dimension_numbers = #tpu.dot_dimension_numbers<[1], [0], [0], [1], [0, 0, 1, 1], [], []>} : vector<8x128xf32>, vector<128x256xf32>, vector<8x256xf32> -> vector<8x256xf32>
    %c0_4 = arith.constant 0 : index
    %c0_5 = arith.constant 0 : index
    %c0_6 = arith.constant 0 : index
    %4 = vector.load %arg4[%c0_4, %c0_5, %c0_6] : memref<1x8x256xf32, #tpu.memory_space<vmem>>, vector<1x8x256xf32>
    %5 = vector.shape_cast %4 : vector<1x8x256xf32> to vector<8x256xf32>
    %6 = vector.shape_cast %3 : vector<8x256xf32> to vector<1x8x256xf32>
    tpu.vector_store %arg4[%c0_4, %c0_5, %c0_6], %6 {strides = array<i32>} : memref<1x8x256xf32, #tpu.memory_space<vmem>>, vector<1x8x256xf32>,
    %cst_7 = arith.constant dense<0.000000e+00> : vector<8xf32>
    %7 = vector.multi_reduction <add>, %3, %cst_7 [1] : vector<8x256xf32> to vector<8xf32>
    %8 = vector.shape_cast %7 : vector<8xf32> to vector<8x1xf32>
    %9 = arith.mulf %3, %3 : vector<8x256xf32>
    %cst_8 = arith.constant dense<0.000000e+00> : vector<8xf32>
    %10 = vector.multi_reduction <add>, %9, %cst_8 [1] : vector<8x256xf32> to vector<8xf32>
    %11 = vector.shape_cast %10 : vector<8xf32> to vector<8x1xf32>
    %12 = tpu.concatenate %8, %11 in 1 : vector<8x1xf32>, vector<8x1xf32> -> vector<8x2xf32>
    %c0_9 = arith.constant 0 : index
    %c0_10 = arith.constant 0 : index
    %c0_11 = arith.constant 0 : index
    %c0_12 = arith.constant 0 : index
    %13 = vector.load %arg5[%c0_9, %c0_10, %c0_11, %c0_12] : memref<1x1x8x2xf32, #tpu.memory_space<vmem>>, vector<1x1x8x2xf32>
    %14 = vector.shape_cast %13 : vector<1x1x8x2xf32> to vector<8x2xf32>
    %15 = vector.shape_cast %12 : vector<8x2xf32> to vector<1x1x8x2xf32>
    tpu.vector_store %arg5[%c0_9, %c0_10, %c0_11, %c0_12], %15 {strides = array<i32>} : memref<1x1x8x2xf32, #tpu.memory_space<vmem>>, vector<1x1x8x2xf32>,
    return
  }
  func.func @transform_0(%arg0: i32, %arg1: i32) -> (i32, i32, i32) {
    %c0_i32 = arith.constant 0 : i32
    %c0_i32_0 = arith.constant 0 : i32
    return %arg0, %c0_i32, %arg1 : i32, i32, i32
  }
  func.func @transform_1(%arg0: i32, %arg1: i32) -> (i32, i32) {
    %c0_i32 = arith.constant 0 : i32
    %c0_i32_0 = arith.constant 0 : i32
    %c0_i32_1 = arith.constant 0 : i32
    return %c0_i32, %c0_i32_0 : i32, i32
  }
  func.func @transform_2(%arg0: i32, %arg1: i32) -> (i32, i32, i32) {
    %c0_i32 = arith.constant 0 : i32
    %c0_i32_0 = arith.constant 0 : i32
    return %arg0, %c0_i32, %arg1 : i32, i32, i32
  }
  func.func @transform_3(%arg0: i32, %arg1: i32) -> (i32, i32, i32, i32) {
    %c0_i32 = arith.constant 0 : i32
    %c0_i32_0 = arith.constant 0 : i32
    %c0_i32_1 = arith.constant 0 : i32
    return %arg0, %arg1, %c0_i32, %c0_i32_0 : i32, i32, i32, i32
  }
}

module attributes {stable_mosaic.version = 11 : i64} {
  func.func @_bn1_relu_gram_kernel(%arg0: i32, %arg1: i32, %arg2: memref<1x8x256xf32, #tpu.memory_space<vmem>>, %arg3: memref<8x1xf32, #tpu.memory_space<vmem>>, %arg4: memref<8x1xf32, #tpu.memory_space<vmem>>, %arg5: memref<1x1x8x9xf32, #tpu.memory_space<vmem>>) attributes {dimension_semantics = [#tpu.dimension_semantics<parallel>, #tpu.dimension_semantics<parallel>], iteration_bounds = array<i64: 2, 1>, scalar_prefetch = 0 : i64, scratch_operands = 0 : i64, tpu.core_type = #tpu.core_type<tc>, window_params = [{transform_indices = @transform_0, window_bounds = array<i64: 1, 8, 256>}, {pipeline_mode = #tpu.pipeline_mode<synchronous>, transform_indices = @transform_1, window_bounds = array<i64: 8, 1>}, {pipeline_mode = #tpu.pipeline_mode<synchronous>, transform_indices = @transform_2, window_bounds = array<i64: 8, 1>}, {transform_indices = @transform_3, window_bounds = array<i64: 1, 1, 8, 9>}]} {
    %c0 = arith.constant 0 : index
    %c0_0 = arith.constant 0 : index
    %c0_1 = arith.constant 0 : index
    %0 = vector.load %arg2[%c0, %c0_0, %c0_1] : memref<1x8x256xf32, #tpu.memory_space<vmem>>, vector<1x8x256xf32>
    %1 = vector.shape_cast %0 : vector<1x8x256xf32> to vector<8x256xf32>
    %c0_2 = arith.constant 0 : index
    %c0_3 = arith.constant 0 : index
    %2 = vector.load %arg3[%c0_2, %c0_3] : memref<8x1xf32, #tpu.memory_space<vmem>>, vector<8x1xf32>
    %3 = vector.broadcast %2 : vector<8x1xf32> to vector<8x256xf32>
    %4 = arith.mulf %1, %3 : vector<8x256xf32>
    %c0_4 = arith.constant 0 : index
    %c0_5 = arith.constant 0 : index
    %5 = vector.load %arg4[%c0_4, %c0_5] : memref<8x1xf32, #tpu.memory_space<vmem>>, vector<8x1xf32>
    %6 = vector.broadcast %5 : vector<8x1xf32> to vector<8x256xf32>
    %7 = arith.addf %4, %6 : vector<8x256xf32>
    %cst = arith.constant 0.000000e+00 : f32
    %8 = vector.broadcast %cst : f32 to vector<8x256xf32>
    %9 = arith.maximumf %7, %8 : vector<8x256xf32>
    %cst_6 = arith.constant dense<0.000000e+00> : vector<8x8xf32>
    %10 = tpu.matmul %9, %9, %cst_6 {dimension_numbers = #tpu.dot_dimension_numbers<[1], [1], [0], [0], [0, 0, 1, 0], [], []>} : vector<8x256xf32>, vector<8x256xf32>, vector<8x8xf32> -> vector<8x8xf32>
    %cst_7 = arith.constant dense<0.000000e+00> : vector<8xf32>
    %11 = vector.multi_reduction <add>, %9, %cst_7 [1] : vector<8x256xf32> to vector<8xf32>
    %12 = vector.shape_cast %11 : vector<8xf32> to vector<8x1xf32>
    %13 = tpu.concatenate %12, %10 in 1 : vector<8x1xf32>, vector<8x8xf32> -> vector<8x9xf32>
    %c0_8 = arith.constant 0 : index
    %c0_9 = arith.constant 0 : index
    %c0_10 = arith.constant 0 : index
    %c0_11 = arith.constant 0 : index
    %14 = vector.load %arg5[%c0_8, %c0_9, %c0_10, %c0_11] : memref<1x1x8x9xf32, #tpu.memory_space<vmem>>, vector<1x1x8x9xf32>
    %15 = vector.shape_cast %14 : vector<1x1x8x9xf32> to vector<8x9xf32>
    %16 = vector.shape_cast %13 : vector<8x9xf32> to vector<1x1x8x9xf32>
    tpu.vector_store %arg5[%c0_8, %c0_9, %c0_10, %c0_11], %16 {strides = array<i32>} : memref<1x1x8x9xf32, #tpu.memory_space<vmem>>, vector<1x1x8x9xf32>,
    return
  }
  func.func @transform_0(%arg0: i32, %arg1: i32) -> (i32, i32, i32) {
    %c0_i32 = arith.constant 0 : i32
    %c0_i32_0 = arith.constant 0 : i32
    return %arg0, %c0_i32, %arg1 : i32, i32, i32
  }
  func.func @transform_1(%arg0: i32, %arg1: i32) -> (i32, i32) {
    %c0_i32 = arith.constant 0 : i32
    %c0_i32_0 = arith.constant 0 : i32
    %c0_i32_1 = arith.constant 0 : i32
    return %c0_i32, %c0_i32_0 : i32, i32
  }
  func.func @transform_2(%arg0: i32, %arg1: i32) -> (i32, i32) {
    %c0_i32 = arith.constant 0 : i32
    %c0_i32_0 = arith.constant 0 : i32
    %c0_i32_1 = arith.constant 0 : i32
    return %c0_i32, %c0_i32_0 : i32, i32
  }
  func.func @transform_3(%arg0: i32, %arg1: i32) -> (i32, i32, i32, i32) {
    %c0_i32 = arith.constant 0 : i32
    %c0_i32_0 = arith.constant 0 : i32
    %c0_i32_1 = arith.constant 0 : i32
    return %arg0, %arg1, %c0_i32, %c0_i32_0 : i32, i32, i32, i32
  }
}

module attributes {stable_mosaic.version = 11 : i64} {
  func.func @_recompute_bn2_kernel(%arg0: i32, %arg1: i32, %arg2: memref<1x8x256xf32, #tpu.memory_space<vmem>>, %arg3: memref<8x1xf32, #tpu.memory_space<vmem>>, %arg4: memref<8x1xf32, #tpu.memory_space<vmem>>, %arg5: memref<128x8xf32, #tpu.memory_space<vmem>>, %arg6: memref<128x1xf32, #tpu.memory_space<vmem>>, %arg7: memref<128x1xf32, #tpu.memory_space<vmem>>, %arg8: memref<1x128x256xf32, #tpu.memory_space<vmem>>) attributes {dimension_semantics = [#tpu.dimension_semantics<parallel>, #tpu.dimension_semantics<parallel>], iteration_bounds = array<i64: 2, 1>, scalar_prefetch = 0 : i64, scratch_operands = 0 : i64, tpu.core_type = #tpu.core_type<tc>, window_params = [{transform_indices = @transform_0, window_bounds = array<i64: 1, 8, 256>}, {pipeline_mode = #tpu.pipeline_mode<synchronous>, transform_indices = @transform_1, window_bounds = array<i64: 8, 1>}, {pipeline_mode = #tpu.pipeline_mode<synchronous>, transform_indices = @transform_2, window_bounds = array<i64: 8, 1>}, {pipeline_mode = #tpu.pipeline_mode<synchronous>, transform_indices = @transform_3, window_bounds = array<i64: 128, 8>}, {pipeline_mode = #tpu.pipeline_mode<synchronous>, transform_indices = @transform_4, window_bounds = array<i64: 128, 1>}, {pipeline_mode = #tpu.pipeline_mode<synchronous>, transform_indices = @transform_5, window_bounds = array<i64: 128, 1>}, {transform_indices = @transform_6, window_bounds = array<i64: 1, 128, 256>}]} {
    %c0 = arith.constant 0 : index
    %c0_0 = arith.constant 0 : index
    %c0_1 = arith.constant 0 : index
    %0 = vector.load %arg2[%c0, %c0_0, %c0_1] : memref<1x8x256xf32, #tpu.memory_space<vmem>>, vector<1x8x256xf32>
    %1 = vector.shape_cast %0 : vector<1x8x256xf32> to vector<8x256xf32>
    %c0_2 = arith.constant 0 : index
    %c0_3 = arith.constant 0 : index
    %2 = vector.load %arg3[%c0_2, %c0_3] : memref<8x1xf32, #tpu.memory_space<vmem>>, vector<8x1xf32>
    %3 = vector.broadcast %2 : vector<8x1xf32> to vector<8x256xf32>
    %4 = arith.mulf %1, %3 : vector<8x256xf32>
    %c0_4 = arith.constant 0 : index
    %c0_5 = arith.constant 0 : index
    %5 = vector.load %arg4[%c0_4, %c0_5] : memref<8x1xf32, #tpu.memory_space<vmem>>, vector<8x1xf32>
    %6 = vector.broadcast %5 : vector<8x1xf32> to vector<8x256xf32>
    %7 = arith.addf %4, %6 : vector<8x256xf32>
    %cst = arith.constant 0.000000e+00 : f32
    %8 = vector.broadcast %cst : f32 to vector<8x256xf32>
    %9 = arith.maximumf %7, %8 : vector<8x256xf32>
    %c0_6 = arith.constant 0 : index
    %c0_7 = arith.constant 0 : index
    %10 = vector.load %arg5[%c0_6, %c0_7] : memref<128x8xf32, #tpu.memory_space<vmem>>, vector<128x8xf32>
    %cst_8 = arith.constant dense<0.000000e+00> : vector<128x256xf32>
    %11 = tpu.matmul %10, %9, %cst_8 {dimension_numbers = #tpu.dot_dimension_numbers<[1], [0], [0], [1], [0, 0, 1, 1], [], []>} : vector<128x8xf32>, vector<8x256xf32>, vector<128x256xf32> -> vector<128x256xf32>
    %c0_9 = arith.constant 0 : index
    %c0_10 = arith.constant 0 : index
    %12 = vector.load %arg6[%c0_9, %c0_10] : memref<128x1xf32, #tpu.memory_space<vmem>>, vector<128x1xf32>
    %13 = vector.broadcast %12 : vector<128x1xf32> to vector<128x256xf32>
    %14 = arith.mulf %11, %13 : vector<128x256xf32>
    %c0_11 = arith.constant 0 : index
    %c0_12 = arith.constant 0 : index
    %15 = vector.load %arg7[%c0_11, %c0_12] : memref<128x1xf32, #tpu.memory_space<vmem>>, vector<128x1xf32>
    %16 = vector.broadcast %15 : vector<128x1xf32> to vector<128x256xf32>
    %17 = arith.addf %14, %16 : vector<128x256xf32>
    %c0_13 = arith.constant 0 : index
    %c0_14 = arith.constant 0 : index
    %c0_15 = arith.constant 0 : index
    %18 = vector.load %arg8[%c0_13, %c0_14, %c0_15] : memref<1x128x256xf32, #tpu.memory_space<vmem>>, vector<1x128x256xf32>
    %19 = vector.shape_cast %18 : vector<1x128x256xf32> to vector<128x256xf32>
    %20 = vector.shape_cast %17 : vector<128x256xf32> to vector<1x128x256xf32>
    tpu.vector_store %arg8[%c0_13, %c0_14, %c0_15], %20 {strides = array<i32>} : memref<1x128x256xf32, #tpu.memory_space<vmem>>, vector<1x128x256xf32>,
    return
  }
  func.func @transform_0(%arg0: i32, %arg1: i32) -> (i32, i32, i32) {
    %c0_i32 = arith.constant 0 : i32
    %c0_i32_0 = arith.constant 0 : i32
    return %arg0, %c0_i32, %arg1 : i32, i32, i32
  }
  func.func @transform_1(%arg0: i32, %arg1: i32) -> (i32, i32) {
    %c0_i32 = arith.constant 0 : i32
    %c0_i32_0 = arith.constant 0 : i32
    %c0_i32_1 = arith.constant 0 : i32
    return %c0_i32, %c0_i32_0 : i32, i32
  }
  func.func @transform_2(%arg0: i32, %arg1: i32) -> (i32, i32) {
    %c0_i32 = arith.constant 0 : i32
    %c0_i32_0 = arith.constant 0 : i32
    %c0_i32_1 = arith.constant 0 : i32
    return %c0_i32, %c0_i32_0 : i32, i32
  }
  func.func @transform_3(%arg0: i32, %arg1: i32) -> (i32, i32) {
    %c0_i32 = arith.constant 0 : i32
    %c0_i32_0 = arith.constant 0 : i32
    %c0_i32_1 = arith.constant 0 : i32
    return %c0_i32, %c0_i32_0 : i32, i32
  }
  func.func @transform_4(%arg0: i32, %arg1: i32) -> (i32, i32) {
    %c0_i32 = arith.constant 0 : i32
    %c0_i32_0 = arith.constant 0 : i32
    %c0_i32_1 = arith.constant 0 : i32
    return %c0_i32, %c0_i32_0 : i32, i32
  }
  func.func @transform_5(%arg0: i32, %arg1: i32) -> (i32, i32) {
    %c0_i32 = arith.constant 0 : i32
    %c0_i32_0 = arith.constant 0 : i32
    %c0_i32_1 = arith.constant 0 : i32
    return %c0_i32, %c0_i32_0 : i32, i32
  }
  func.func @transform_6(%arg0: i32, %arg1: i32) -> (i32, i32, i32) {
    %c0_i32 = arith.constant 0 : i32
    %c0_i32_0 = arith.constant 0 : i32
    return %arg0, %c0_i32, %arg1 : i32, i32, i32
  }
}

</mosaic_0001>

<llo_original>
// kernel: local_attention_forward.3
$region0: #{local_attention_forward.3}
  #allocation0 [shape = 'u32[]', space=smem, size = 0x4, offset = 0x4, fixed_abs, tag = 'smem constant byte address 0x4 - core index']
  #allocation1 [shape = 'u32[72,128]{1,0:T(1,128)}', space=vmem, size = 0x9000, scoped, tag = 'internal scratch']
  %s0 = inlined_call_operand.vmem [shape: f32[2,128,256], index: 0, kind: input, shape index: {}]
  %s1 = inlined_call_operand.vmem [shape: f32[8,128], index: 1, kind: input, shape index: {}]
  %s2 = inlined_call_operand.vmem [shape: f32[2,8,256], index: 2, kind: output, shape index: {0}]
  %s3 = inlined_call_operand.vmem [shape: f32[2,1,8,2], index: 3, kind: output, shape index: {1}]
  %4 = xla_tuple %s2, %s3
  %s5 = sld [smem:[#allocation0]]
  $region49: #{local_attention_forward.3} parent=0
    _
  %s7 = ssub.s32 1, %s5
  %s8 = scalar_select 0, %s7, %s5
  loop: start=0, step=1, limit=4
  $region2: #{local_attention_forward.3} parent=0 // loop_pre_header
    _
  $region3: #{local_attention_forward.3} parent=0 // loop_header
    %s10 = sphi 0, %s14
    %p11 = scmp.ge.s32.totalorder %s10, 4
    %s17 = sphi 0, %s29
    %s18 = sphi 0, %s25
    %s19 = sphi 0, %s17
    %s20 = sphi 0, %s18
    %s21 = sphi 0, %s19
    %s22 = sphi 0, %s20
    %s34 = sphi 0, %s36
    %s37 = sphi 0, %s34
    %s38 = sphi 0, %s37
    %s54 = sphi 0, %s38
    %s58 = sphi 0, %s58
    %s60 = sphi 0, %s58
    %s61 = sphi 0, %s60
    %s75 = sphi 0, %s61
    %s83 = sphi 0, %s85
    %s86 = sphi 0, %s83
    %s87 = sphi 0, %s86
    %s103 = sphi 0, %s87
    %s111 = sphi 0, %s113
    %s114 = sphi 0, %s111
    %s115 = sphi 0, %s114
    %s131 = sphi 0, %s115
  $region4: #{local_attention_forward.3} parent=0 // loop_header_branch
    %13 = sbr.rel (%p11) target = $region8
  $region5: #{local_attention_forward.3} parent=0 // loop_body
    %s15 = ssub.s32 %s10, 1
    %s16 = ssub.s32 %s10, 2
    %s23 = sadd.s32 1, %s18
    %p24 = scmp.ge.s32.totalorder %s23, 1
    %s25 = scalar_select %p24, 0, %s23
    %s26 = sadd.s32 1, %s17
    %s27 = scalar_select %p24, %s26, %s17
    %p28 = scmp.ge.s32.totalorder %s27, 2
    %s29 = scalar_select %p28, 0, %s27
    %s30 = ssub.s32 %s17, %s29
    %s31 = ssub.s32 %s18, %s25
    %s32 = sor.u32 %s30, %s31
    %p33 = scmp.eq.s32.totalorder %s32, 0
    %s35 = sadd.s32 %s34, 1
    %s36 = scalar_select %p33, %s34, %s35
    %p39 = pneg %p33
    %p40 = scmp.eq.s32.totalorder %s10, 1
    %p41 = por %p39, %p40
    %p42 = scmp.ne.s32.totalorder %s34, %s37
    %p43 = scmp.eq.s32.totalorder %s10, 0
    %p44 = por %p42, %p43
    %p45 = scmp.ne.s32.totalorder %s34, %s37
    %p46 = scmp.eq.s32.totalorder %s15, 1
    %p47 = por %p45, %p46
    %p48 = scmp.ne.s32.totalorder %s37, %s38
    %p49 = scmp.eq.s32.totalorder %s15, 0
    %p50 = por %p48, %p49
    %p51 = scmp.ne.s32.totalorder %s37, %s38
    %p52 = scmp.eq.s32.totalorder %s16, 1
    %p53 = por %p51, %p52
    %p55 = scmp.ne.s32.totalorder %s38, %s54
    %p56 = scmp.eq.s32.totalorder %s16, 0
    %p57 = por %p55, %p56
    %s59 = sadd.s32 %s58, 1
    %p62 = scmp.eq.s32.totalorder %s10, 1
    %p63 = scmp.ne.s32.totalorder %s58, %s60
    %p64 = scmp.eq.s32.totalorder %s10, 0
    %p65 = por %p63, %p64
    %p66 = scmp.ne.s32.totalorder %s58, %s60
    %p67 = scmp.eq.s32.totalorder %s15, 1
    %p68 = por %p66, %p67
    %p69 = scmp.ne.s32.totalorder %s60, %s61
    %p70 = scmp.eq.s32.totalorder %s15, 0
    %p71 = por %p69, %p70
    %p72 = scmp.ne.s32.totalorder %s60, %s61
    %p73 = scmp.eq.s32.totalorder %s16, 1
    %p74 = por %p72, %p73
    %p76 = scmp.ne.s32.totalorder %s61, %s75
    %p77 = scmp.eq.s32.totalorder %s16, 0
    %p78 = por %p76, %p77
    %s79 = ssub.s32 %s17, %s29
    %s80 = ssub.s32 %s18, %s25
    %s81 = sor.u32 %s79, %s80
    %p82 = scmp.eq.s32.totalorder %s81, 0
    %s84 = sadd.s32 %s83, 1
    %s85 = scalar_select %p82, %s83, %s84
    %p88 = pneg %p82
    %p89 = scmp.eq.s32.totalorder %s10, 1
    %p90 = por %p88, %p89
    %p91 = scmp.ne.s32.totalorder %s83, %s86
    %p92 = scmp.eq.s32.totalorder %s10, 0
    %p93 = por %p91, %p92
    %p94 = scmp.ne.s32.totalorder %s83, %s86
    %p95 = scmp.eq.s32.totalorder %s15, 1
    %p96 = por %p94, %p95
    %p97 = scmp.ne.s32.totalorder %s86, %s87
    %p98 = scmp.eq.s32.totalorder %s15, 0
    %p99 = por %p97, %p98
    %p100 = scmp.ne.s32.totalorder %s86, %s87
    %p101 = scmp.eq.s32.totalorder %s16, 1
    %p102 = por %p100, %p101
    %p104 = scmp.ne.s32.totalorder %s87, %s103
    %p105 = scmp.eq.s32.totalorder %s16, 0
    %p106 = por %p104, %p105
    %s107 = ssub.s32 %s17, %s29
    %s108 = ssub.s32 %s18, %s25
    %s109 = sor.u32 %s107, %s108
    %p110 = scmp.eq.s32.totalorder %s109, 0
    %s112 = sadd.s32 %s111, 1
    %s113 = scalar_select %p110, %s111, %s112
    %p116 = pneg %p110
    %p117 = scmp.eq.s32.totalorder %s10, 1
    %p118 = por %p116, %p117
    %p119 = scmp.ne.s32.totalorder %s111, %s114
    %p120 = scmp.eq.s32.totalorder %s10, 0
    %p121 = por %p119, %p120
    %p122 = scmp.ne.s32.totalorder %s111, %s114
    %p123 = scmp.eq.s32.totalorder %s15, 1
    %p124 = por %p122, %p123
    %p125 = scmp.ne.s32.totalorder %s114, %s115
    %p126 = scmp.eq.s32.totalorder %s15, 0
    %p127 = por %p125, %p126
    %p128 = scmp.ne.s32.totalorder %s114, %s115
    %p129 = scmp.eq.s32.totalorder %s16, 1
    %p130 = por %p128, %p129
    %p132 = scmp.ne.s32.totalorder %s115, %s131
    %p133 = scmp.eq.s32.totalorder %s16, 0
    %p134 = por %p132, %p133
    %p135 = scmp.le.s32.totalorder 1, %s10
    %p136 = scmp.lt.s32.totalorder %s10, 3
    %p137 = pnand %p135, %p136
    %p138 = pneg %p137
    // Predicated region
    $region9: #{local_attention_forward.3} parent=5 // pred_check
      _
    $region10: #{local_attention_forward.3} parent=5 // pred_check_branch
      %140 = sbr.rel (%p137) target = $region12
    $region11: #{local_attention_forward.3} parent=5 // pred_region
      %s141 = ssub.s32 %s10, 1
      // Predicated region
      $region13: #{local_attention_forward.3} parent=11 // pred_check
        %p142 = pneg %p71
      $region14: #{local_attention_forward.3} parent=11 // pred_check_branch
        %144 = sbr.rel (%p142) target = $region16
      $region15: #{local_attention_forward.3} parent=11 // pred_region
        _
      $region16: #{local_attention_forward.3} parent=11 // pred_fallthru
        _
    $region12: #{local_attention_forward.3} parent=5 // pred_fallthru
      _
    %p145 = scmp.lt.s32.totalorder %s10, 2
    // Predicated region
    $region17: #{local_attention_forward.3} parent=5 // pred_check
      %p146 = pneg %p145
    $region18: #{local_attention_forward.3} parent=5 // pred_check_branch
      %148 = sbr.rel (%p146) target = $region20
    $region19: #{local_attention_forward.3} parent=5 // pred_region
      // Predicated region
      $region21: #{local_attention_forward.3} parent=19 // pred_check
        %p149 = pneg %p44
      $region22: #{local_attention_forward.3} parent=19 // pred_check_branch
        %151 = sbr.rel (%p149) target = $region24
      $region23: #{local_attention_forward.3} parent=19 // pred_region
        %s152 = smul.u32 2, %s18
        %p153 = scmp.lt.s32.totalorder %s17, 1
        %s154 = scalar_select %p153, %s17, 1
        %p155 = scmp.lt.s32.totalorder %s152, 1
        %s156 = scalar_select %p155, %s152, 1
        %s157 = smul.addr %s154, 32
        %s158 = sadd.s32 %s156, %s157
        %s159 = smul.addr %s158, 8
        %s160 = scalar_lea.vmem %s0, %s159
        %s161 = smul.u32 2, %s18
      $region24: #{local_attention_forward.3} parent=19 // pred_fallthru
        _
    $region20: #{local_attention_forward.3} parent=5 // pred_fallthru
      _
    %p162 = scmp.le.s32.totalorder 1, %s10
    %p163 = scmp.lt.s32.totalorder %s10, 3
    %p164 = pnand %p162, %p163
    %p165 = pneg %p164
    // Predicated region
    $region25: #{local_attention_forward.3} parent=5 // pred_check
      _
    $region26: #{local_attention_forward.3} parent=5 // pred_check_branch
      %167 = sbr.rel (%p164) target = $region28
    $region27: #{local_attention_forward.3} parent=5 // pred_region
      %s168 = ssub.s32 %s10, 1
      %s169 = smul.u32 2, %s20
      %p170 = scmp.lt.s32.totalorder %s19, 1
      %s171 = scalar_select %p170, %s19, 1
      %p172 = scmp.lt.s32.totalorder %s169, 1
      %s173 = scalar_select %p172, %s169, 1
      %s174 = smul.addr %s171, 32
      %s175 = sadd.s32 %s173, %s174
      %s176 = smul.addr %s175, 8
      %s177 = scalar_lea.vmem %s0, %s176
      %p178 = pneg %p50
      %p179 = pneg %p47
      %p180 = pneg %p71
      %p181 = pneg %p68
      %p182 = pneg %p99
      %p183 = pneg %p96
      %s184 = smul.u32 2, %s20
      %p185 = scmp.lt.s32.totalorder %s19, 1
      %s186 = scalar_select %p185, %s19, 1
      %p187 = scmp.lt.s32.totalorder %s184, 1
      %s188 = scalar_select %p187, %s184, 1
      %s189 = smul.addr %s186, 2
      %s190 = sadd.s32 %s188, %s189
      %s191 = smul.addr %s190, 8
      %s192 = scalar_lea.vmem %s2, %s191
      %p193 = pneg %p127
      %p194 = pneg %p124
      %p195 = scmp.lt.s32.totalorder %s19, 1
      %s196 = scalar_select %p195, %s19, 1
      %p197 = scmp.lt.s32.totalorder %s20, 0
      %s198 = scalar_select %p197, %s20, 0
      %s199 = sadd.s32 %s198, %s196
      %s200 = smul.addr %s199, 8
      %s201 = scalar_lea.vmem %s3, %s200
      %s202 = smul.u32 2, %s20
      %p203 = scmp.lt.s32.totalorder %s19, 1
      %s204 = scalar_select %p203, %s19, 1
      %p205 = scmp.lt.s32.totalorder %s202, 1
      %s206 = scalar_select %p205, %s202, 1
      %s207 = smul.addr %s204, 32
      %s208 = sadd.s32 %s206, %s207
      %s209 = smul.addr %s208, 8
      %s210 = scalar_lea.vmem %s0, %s209
      %s211 = smul.u32 2, %s20
      %s212 = smul.u32 2, %s20
      %p213 = scmp.lt.s32.totalorder %s19, 1
      %s214 = scalar_select %p213, %s19, 1
      %p215 = scmp.lt.s32.totalorder %s212, 1
      %s216 = scalar_select %p215, %s212, 1
      %s217 = smul.addr %s214, 2
      %s218 = sadd.s32 %s216, %s217
      %s219 = smul.addr %s218, 8
      %s220 = scalar_lea.vmem %s2, %s219
      %s221 = smul.u32 2, %s20
      %p222 = scmp.lt.s32.totalorder %s19, 1
      %s223 = scalar_select %p222, %s19, 1
      %p224 = scmp.lt.s32.totalorder %s20, 0
      %s225 = scalar_select %p224, %s20, 0
      %s226 = sadd.s32 %s225, %s223
      %s227 = smul.addr %s226, 8
      %s228 = scalar_lea.vmem %s3, %s227
      %v229 = vld [vmem:[%s1] sm:$0xff]
      %v230 = vld [vmem:[%s210] sm:$0xff]
      %v231 = vld [vmem:[%s210 + $0x8] sm:$0xff]
      %v232 = vld [vmem:[%s210 + $0x10] sm:$0xff]
      %v233 = vld [vmem:[%s210 + $0x18] sm:$0xff]
      %v234 = vld [vmem:[%s210 + $0x20] sm:$0xff]
      %v235 = vld [vmem:[%s210 + $0x28] sm:$0xff]
      %v236 = vld [vmem:[%s210 + $0x30] sm:$0xff]
      %v237 = vld [vmem:[%s210 + $0x38] sm:$0xff]
      %v238 = vld [vmem:[%s210 + $0x40] sm:$0xff]
      %v239 = vld [vmem:[%s210 + $0x48] sm:$0xff]
      %v240 = vld [vmem:[%s210 + $0x50] sm:$0xff]
      %v241 = vld [vmem:[%s210 + $0x58] sm:$0xff]
      %v242 = vld [vmem:[%s210 + $0x60] sm:$0xff]
      %v243 = vld [vmem:[%s210 + $0x68] sm:$0xff]
      %v244 = vld [vmem:[%s210 + $0x70] sm:$0xff]
      %v245 = vld [vmem:[%s210 + $0x78] sm:$0xff]
      %v246 = vld [vmem:[%s210 + $0x80] sm:$0xff]
      %v247 = vld [vmem:[%s210 + $0x88] sm:$0xff]
      %v248 = vld [vmem:[%s210 + $0x90] sm:$0xff]
      %v249 = vld [vmem:[%s210 + $0x98] sm:$0xff]
      %v250 = vld [vmem:[%s210 + $0xa0] sm:$0xff]
      %v251 = vld [vmem:[%s210 + $0xa8] sm:$0xff]
      %v252 = vld [vmem:[%s210 + $0xb0] sm:$0xff]
      %v253 = vld [vmem:[%s210 + $0xb8] sm:$0xff]
      %v254 = vld [vmem:[%s210 + $0xc0] sm:$0xff]
      %v255 = vld [vmem:[%s210 + $0xc8] sm:$0xff]
      %v256 = vld [vmem:[%s210 + $0xd0] sm:$0xff]
      %v257 = vld [vmem:[%s210 + $0xd8] sm:$0xff]
      %v258 = vld [vmem:[%s210 + $0xe0] sm:$0xff]
      %v259 = vld [vmem:[%s210 + $0xe8] sm:$0xff]
      %v260 = vld [vmem:[%s210 + $0xf0] sm:$0xff]
      %v261 = vld [vmem:[%s210 + $0xf8] sm:$0xff]
      %262 = vmatpush.msra.mxu0 %v260
      %263 = vmatpush.msra.mxu0 %v258
      %264 = vmatpush.msra.mxu0 %v256
      %265 = vmatpush.msra.mxu0 %v254
      %266 = vmatpush.msra.mxu0 %v252
      %267 = vmatpush.msra.mxu0 %v250
      %268 = vmatpush.msra.mxu0 %v248
      %269 = vmatpush.msra.mxu0 %v246
      %270 = vmatpush.msra.mxu0 %v244
      %271 = vmatpush.msra.mxu0 %v242
      %272 = vmatpush.msra.mxu0 %v240
      %273 = vmatpush.msra.mxu0 %v238
      %274 = vmatpush.msra.mxu0 %v236
      %275 = vmatpush.msra.mxu0 %v234
      %276 = vmatpush.msra.mxu0 %v232
      %277 = vmatpush.msra.mxu0 %v230
      %278 = vmatmul.f32.gmra.mxu0 %v229
      %v279 = vpop.f32.mrf.mxu0
      %v280 = vadd.f32 0.0, %v279
      %281 = vdwg.mxu0
      %282 = vmatpush.msra.mxu0 %v261
      %283 = vmatpush.msra.mxu0 %v259
      %284 = vmatpush.msra.mxu0 %v257
      %285 = vmatpush.msra.mxu0 %v255
      %286 = vmatpush.msra.mxu0 %v253
      %287 = vmatpush.msra.mxu0 %v251
      %288 = vmatpush.msra.mxu0 %v249
      %289 = vmatpush.msra.mxu0 %v247
      %290 = vmatpush.msra.mxu0 %v245
      %291 = vmatpush.msra.mxu0 %v243
      %292 = vmatpush.msra.mxu0 %v241
      %293 = vmatpush.msra.mxu0 %v239
      %294 = vmatpush.msra.mxu0 %v237
      %295 = vmatpush.msra.mxu0 %v235
      %296 = vmatpush.msra.mxu0 %v233
      %297 = vmatpush.msra.mxu0 %v231
      %298 = vmatmul.f32.gmra.mxu0 %v229
      %v299 = vpop.f32.mrf.mxu0
      %v300 = vadd.f32 0.0, %v299
      %301 = vdwg.mxu0
      %302 = vst [vmem:[%s220] sm:$0xff] %v280
      %303 = vst [vmem:[%s220 + $0x8] sm:$0xff] %v300
      %v304 = vadd.f32 %v280, %v300
      %305 = vadd.xlane.f32.xlu0 %v304
      %v306 = vpop.xlane.xlu0 %305
      %v307 = vmul.f32 %v280, %v280
      %v308 = vmul.f32 %v300, %v300
      %v309 = vadd.f32 %v307, %v308
      %310 = vadd.xlane.f32.xlu0 %v309
      %v311 = vpop.xlane.xlu0 %310
      %vm312 = vcmask 7168
      %v313 = vsel %vm312, %v306, %v311
      %vm314 = vcmask 15360
      %315 = vst.msk [vmem:[%s228] sm:$0xff] %vm314, %v313
      %s316 = smul.u32 2, %s20
      %p317 = scmp.lt.s32.totalorder %s19, 1
      %s318 = scalar_select %p317, %s19, 1
      %p319 = scmp.lt.s32.totalorder %s316, 1
      %s320 = scalar_select %p319, %s316, 1
      %s321 = smul.addr %s318, 2
      %s322 = sadd.s32 %s320, %s321
      %s323 = smul.addr %s322, 8
      %s324 = scalar_lea.vmem %s2, %s323
      %p325 = scmp.lt.s32.totalorder %s19, 1
      %s326 = scalar_select %p325, %s19, 1
      %p327 = scmp.lt.s32.totalorder %s20, 0
      %s328 = scalar_select %p327, %s20, 0
      %s329 = sadd.s32 %s328, %s326
      %s330 = smul.addr %s329, 8
      %s331 = scalar_lea.vmem %s3, %s330
      // Predicated region
      $region29: #{local_attention_forward.3} parent=27 // pred_check
        %p332 = pneg %p96
      $region30: #{local_attention_forward.3} parent=27 // pred_check_branch
        %334 = sbr.rel (%p332) target = $region32
      $region31: #{local_attention_forward.3} parent=27 // pred_region
        %s335 = smul.u32 2, %s20
      $region32: #{local_attention_forward.3} parent=27 // pred_fallthru
        _
      // Predicated region
      $region33: #{local_attention_forward.3} parent=27 // pred_check
        %p336 = pneg %p124
      $region34: #{local_attention_forward.3} parent=27 // pred_check_branch
        %338 = sbr.rel (%p336) target = $region36
      $region35: #{local_attention_forward.3} parent=27 // pred_region
        _
      $region36: #{local_attention_forward.3} parent=27 // pred_fallthru
        _
    $region28: #{local_attention_forward.3} parent=5 // pred_fallthru
      _
    %p339 = scmp.le.s32.totalorder 2, %s10
    // Predicated region
    $region37: #{local_attention_forward.3} parent=5 // pred_check
      %p340 = pneg %p339
    $region38: #{local_attention_forward.3} parent=5 // pred_check_branch
      %342 = sbr.rel (%p340) target = $region40
    $region39: #{local_attention_forward.3} parent=5 // pred_region
      %s343 = ssub.s32 %s10, 2
      // Predicated region
      $region41: #{local_attention_forward.3} parent=39 // pred_check
        %p344 = pneg %p102
      $region42: #{local_attention_forward.3} parent=39 // pred_check_branch
        %346 = sbr.rel (%p344) target = $region44
      $region43: #{local_attention_forward.3} parent=39 // pred_region
        %s347 = smul.u32 2, %s22
        %p348 = scmp.lt.s32.totalorder %s21, 1
        %s349 = scalar_select %p348, %s21, 1
        %p350 = scmp.lt.s32.totalorder %s347, 1
        %s351 = scalar_select %p350, %s347, 1
        %s352 = smul.addr %s349, 2
        %s353 = sadd.s32 %s351, %s352
        %s354 = smul.addr %s353, 8
        %s355 = scalar_lea.vmem %s2, %s354
      $region44: #{local_attention_forward.3} parent=39 // pred_fallthru
        _
      // Predicated region
      $region45: #{local_attention_forward.3} parent=39 // pred_check
        %p356 = pneg %p130
      $region46: #{local_attention_forward.3} parent=39 // pred_check_branch
        %358 = sbr.rel (%p356) target = $region48
      $region47: #{local_attention_forward.3} parent=39 // pred_region
        %p359 = scmp.lt.s32.totalorder %s21, 1
        %s360 = scalar_select %p359, %s21, 1
        %p361 = scmp.lt.s32.totalorder %s22, 0
        %s362 = scalar_select %p361, %s22, 0
        %s363 = sadd.s32 %s362, %s360
        %s364 = smul.addr %s363, 8
        %s365 = scalar_lea.vmem %s3, %s364
      $region48: #{local_attention_forward.3} parent=39 // pred_fallthru
        _
    $region40: #{local_attention_forward.3} parent=5 // pred_fallthru
      _
  $region6: #{local_attention_forward.3} parent=0 // loop_footer
    %s14 = sadd.s32 1, %s10
  $region7: #{local_attention_forward.3} parent=0 // loop_footer_branch
    %9 = sbr.rel target = $region3
  $region8: #{local_attention_forward.3} parent=0 // loop_exit
    _

// kernel: local_attention_forward.4
$region0: #{local_attention_forward.4}
  #allocation0 [shape = 'u32[]', space=smem, size = 0x4, offset = 0x4, fixed_abs, tag = 'smem constant byte address 0x4 - core index']
  #allocation1 [shape = 'u32[72,128]{1,0:T(1,128)}', space=vmem, size = 0x9000, scoped, tag = 'internal scratch']
  %s0 = inlined_call_operand.vmem [shape: f32[2,8,256], index: 0, kind: input, shape index: {}]
  %s1 = inlined_call_operand.vmem [shape: f32[8,1], index: 1, kind: input, shape index: {}]
  %s2 = inlined_call_operand.vmem [shape: f32[8,1], index: 2, kind: input, shape index: {}]
  %s3 = inlined_call_operand.vmem [shape: f32[2,1,8,9], index: 3, kind: output, shape index: {}]
  %s4 = sld [smem:[#allocation0]]
  $region45: #{local_attention_forward.4} parent=0
    _
  %s6 = ssub.s32 1, %s4
  %s7 = scalar_select 0, %s6, %s4
  loop: start=0, step=1, limit=4
  $region2: #{local_attention_forward.4} parent=0 // loop_pre_header
    _
  $region3: #{local_attention_forward.4} parent=0 // loop_header
    %s9 = sphi 0, %s13
    %p10 = scmp.ge.s32.totalorder %s9, 4
    %s16 = sphi 0, %s28
    %s17 = sphi 0, %s24
    %s18 = sphi 0, %s16
    %s19 = sphi 0, %s17
    %s20 = sphi 0, %s18
    %s21 = sphi 0, %s19
    %s33 = sphi 0, %s35
    %s36 = sphi 0, %s33
    %s37 = sphi 0, %s36
    %s53 = sphi 0, %s37
    %s57 = sphi 0, %s57
    %s59 = sphi 0, %s57
    %s60 = sphi 0, %s59
    %s74 = sphi 0, %s60
    %s78 = sphi 0, %s78
    %s80 = sphi 0, %s78
    %s81 = sphi 0, %s80
    %s95 = sphi 0, %s81
    %s103 = sphi 0, %s105
    %s106 = sphi 0, %s103
    %s107 = sphi 0, %s106
    %s123 = sphi 0, %s107
  $region4: #{local_attention_forward.4} parent=0 // loop_header_branch
    %12 = sbr.rel (%p10) target = $region8
  $region5: #{local_attention_forward.4} parent=0 // loop_body
    %s14 = ssub.s32 %s9, 1
    %s15 = ssub.s32 %s9, 2
    %s22 = sadd.s32 1, %s17
    %p23 = scmp.ge.s32.totalorder %s22, 1
    %s24 = scalar_select %p23, 0, %s22
    %s25 = sadd.s32 1, %s16
    %s26 = scalar_select %p23, %s25, %s16
    %p27 = scmp.ge.s32.totalorder %s26, 2
    %s28 = scalar_select %p27, 0, %s26
    %s29 = ssub.s32 %s16, %s28
    %s30 = ssub.s32 %s17, %s24
    %s31 = sor.u32 %s29, %s30
    %p32 = scmp.eq.s32.totalorder %s31, 0
    %s34 = sadd.s32 %s33, 1
    %s35 = scalar_select %p32, %s33, %s34
    %p38 = pneg %p32
    %p39 = scmp.eq.s32.totalorder %s9, 1
    %p40 = por %p38, %p39
    %p41 = scmp.ne.s32.totalorder %s33, %s36
    %p42 = scmp.eq.s32.totalorder %s9, 0
    %p43 = por %p41, %p42
    %p44 = scmp.ne.s32.totalorder %s33, %s36
    %p45 = scmp.eq.s32.totalorder %s14, 1
    %p46 = por %p44, %p45
    %p47 = scmp.ne.s32.totalorder %s36, %s37
    %p48 = scmp.eq.s32.totalorder %s14, 0
    %p49 = por %p47, %p48
    %p50 = scmp.ne.s32.totalorder %s36, %s37
    %p51 = scmp.eq.s32.totalorder %s15, 1
    %p52 = por %p50, %p51
    %p54 = scmp.ne.s32.totalorder %s37, %s53
    %p55 = scmp.eq.s32.totalorder %s15, 0
    %p56 = por %p54, %p55
    %s58 = sadd.s32 %s57, 1
    %p61 = scmp.eq.s32.totalorder %s9, 1
    %p62 = scmp.ne.s32.totalorder %s57, %s59
    %p63 = scmp.eq.s32.totalorder %s9, 0
    %p64 = por %p62, %p63
    %p65 = scmp.ne.s32.totalorder %s57, %s59
    %p66 = scmp.eq.s32.totalorder %s14, 1
    %p67 = por %p65, %p66
    %p68 = scmp.ne.s32.totalorder %s59, %s60
    %p69 = scmp.eq.s32.totalorder %s14, 0
    %p70 = por %p68, %p69
    %p71 = scmp.ne.s32.totalorder %s59, %s60
    %p72 = scmp.eq.s32.totalorder %s15, 1
    %p73 = por %p71, %p72
    %p75 = scmp.ne.s32.totalorder %s60, %s74
    %p76 = scmp.eq.s32.totalorder %s15, 0
    %p77 = por %p75, %p76
    %s79 = sadd.s32 %s78, 1
    %p82 = scmp.eq.s32.totalorder %s9, 1
    %p83 = scmp.ne.s32.totalorder %s78, %s80
    %p84 = scmp.eq.s32.totalorder %s9, 0
    %p85 = por %p83, %p84
    %p86 = scmp.ne.s32.totalorder %s78, %s80
    %p87 = scmp.eq.s32.totalorder %s14, 1
    %p88 = por %p86, %p87
    %p89 = scmp.ne.s32.totalorder %s80, %s81
    %p90 = scmp.eq.s32.totalorder %s14, 0
    %p91 = por %p89, %p90
    %p92 = scmp.ne.s32.totalorder %s80, %s81
    %p93 = scmp.eq.s32.totalorder %s15, 1
    %p94 = por %p92, %p93
    %p96 = scmp.ne.s32.totalorder %s81, %s95
    %p97 = scmp.eq.s32.totalorder %s15, 0
    %p98 = por %p96, %p97
    %s99 = ssub.s32 %s16, %s28
    %s100 = ssub.s32 %s17, %s24
    %s101 = sor.u32 %s99, %s100
    %p102 = scmp.eq.s32.totalorder %s101, 0
    %s104 = sadd.s32 %s103, 1
    %s105 = scalar_select %p102, %s103, %s104
    %p108 = pneg %p102
    %p109 = scmp.eq.s32.totalorder %s9, 1
    %p110 = por %p108, %p109
    %p111 = scmp.ne.s32.totalorder %s103, %s106
    %p112 = scmp.eq.s32.totalorder %s9, 0
    %p113 = por %p111, %p112
    %p114 = scmp.ne.s32.totalorder %s103, %s106
    %p115 = scmp.eq.s32.totalorder %s14, 1
    %p116 = por %p114, %p115
    %p117 = scmp.ne.s32.totalorder %s106, %s107
    %p118 = scmp.eq.s32.totalorder %s14, 0
    %p119 = por %p117, %p118
    %p120 = scmp.ne.s32.totalorder %s106, %s107
    %p121 = scmp.eq.s32.totalorder %s15, 1
    %p122 = por %p120, %p121
    %p124 = scmp.ne.s32.totalorder %s107, %s123
    %p125 = scmp.eq.s32.totalorder %s15, 0
    %p126 = por %p124, %p125
    %p127 = scmp.le.s32.totalorder 1, %s9
    %p128 = scmp.lt.s32.totalorder %s9, 3
    %p129 = pnand %p127, %p128
    %p130 = pneg %p129
    // Predicated region
    $region9: #{local_attention_forward.4} parent=5 // pred_check
      _
    $region10: #{local_attention_forward.4} parent=5 // pred_check_branch
      %132 = sbr.rel (%p129) target = $region12
    $region11: #{local_attention_forward.4} parent=5 // pred_region
      %s133 = ssub.s32 %s9, 1
      // Predicated region
      $region13: #{local_attention_forward.4} parent=11 // pred_check
        %p134 = pneg %p70
      $region14: #{local_attention_forward.4} parent=11 // pred_check_branch
        %136 = sbr.rel (%p134) target = $region16
      $region15: #{local_attention_forward.4} parent=11 // pred_region
        _
      $region16: #{local_attention_forward.4} parent=11 // pred_fallthru
        _
      // Predicated region
      $region17: #{local_attention_forward.4} parent=11 // pred_check
        %p137 = pneg %p91
      $region18: #{local_attention_forward.4} parent=11 // pred_check_branch
        %139 = sbr.rel (%p137) target = $region20
      $region19: #{local_attention_forward.4} parent=11 // pred_region
        _
      $region20: #{local_attention_forward.4} parent=11 // pred_fallthru
        _
    $region12: #{local_attention_forward.4} parent=5 // pred_fallthru
      _
    %p140 = scmp.lt.s32.totalorder %s9, 2
    // Predicated region
    $region21: #{local_attention_forward.4} parent=5 // pred_check
      %p141 = pneg %p140
    $region22: #{local_attention_forward.4} parent=5 // pred_check_branch
      %143 = sbr.rel (%p141) target = $region24
    $region23: #{local_attention_forward.4} parent=5 // pred_region
      // Predicated region
      $region25: #{local_attention_forward.4} parent=23 // pred_check
        %p144 = pneg %p43
      $region26: #{local_attention_forward.4} parent=23 // pred_check_branch
        %146 = sbr.rel (%p144) target = $region28
      $region27: #{local_attention_forward.4} parent=23 // pred_region
        %s147 = smul.u32 2, %s17
        %p148 = scmp.lt.s32.totalorder %s16, 1
        %s149 = scalar_select %p148, %s16, 1
        %p150 = scmp.lt.s32.totalorder %s147, 1
        %s151 = scalar_select %p150, %s147, 1
        %s152 = smul.addr %s149, 2
        %s153 = sadd.s32 %s151, %s152
        %s154 = smul.addr %s153, 8
        %s155 = scalar_lea.vmem %s0, %s154
        %s156 = smul.u32 2, %s17
      $region28: #{local_attention_forward.4} parent=23 // pred_fallthru
        _
    $region24: #{local_attention_forward.4} parent=5 // pred_fallthru
      _
    %p157 = scmp.le.s32.totalorder 1, %s9
    %p158 = scmp.lt.s32.totalorder %s9, 3
    %p159 = pnand %p157, %p158
    %p160 = pneg %p159
    // Predicated region
    $region29: #{local_attention_forward.4} parent=5 // pred_check
      _
    $region30: #{local_attention_forward.4} parent=5 // pred_check_branch
      %162 = sbr.rel (%p159) target = $region32
    $region31: #{local_attention_forward.4} parent=5 // pred_region
      %s163 = ssub.s32 %s9, 1
      %s164 = smul.u32 2, %s19
      %p165 = scmp.lt.s32.totalorder %s18, 1
      %s166 = scalar_select %p165, %s18, 1
      %p167 = scmp.lt.s32.totalorder %s164, 1
      %s168 = scalar_select %p167, %s164, 1
      %s169 = smul.addr %s166, 2
      %s170 = sadd.s32 %s168, %s169
      %s171 = smul.addr %s170, 8
      %s172 = scalar_lea.vmem %s0, %s171
      %p173 = pneg %p49
      %p174 = pneg %p46
      %p175 = pneg %p70
      %p176 = pneg %p67
      %p177 = pneg %p91
      %p178 = pneg %p88
      %p179 = pneg %p119
      %p180 = pneg %p116
      %p181 = scmp.lt.s32.totalorder %s18, 1
      %s182 = scalar_select %p181, %s18, 1
      %p183 = scmp.lt.s32.totalorder %s19, 0
      %s184 = scalar_select %p183, %s19, 0
      %s185 = sadd.s32 %s184, %s182
      %s186 = smul.addr %s185, 8
      %s187 = scalar_lea.vmem %s3, %s186
      %s188 = smul.u32 2, %s19
      %p189 = scmp.lt.s32.totalorder %s18, 1
      %s190 = scalar_select %p189, %s18, 1
      %p191 = scmp.lt.s32.totalorder %s188, 1
      %s192 = scalar_select %p191, %s188, 1
      %s193 = smul.addr %s190, 2
      %s194 = sadd.s32 %s192, %s193
      %s195 = smul.addr %s194, 8
      %s196 = scalar_lea.vmem %s0, %s195
      %s197 = smul.u32 2, %s19
      %p198 = scmp.lt.s32.totalorder %s18, 1
      %s199 = scalar_select %p198, %s18, 1
      %p200 = scmp.lt.s32.totalorder %s19, 0
      %s201 = scalar_select %p200, %s19, 0
      %s202 = sadd.s32 %s201, %s199
      %s203 = smul.addr %s202, 8
      %s204 = scalar_lea.vmem %s3, %s203
      %v205 = vld [vmem:[%s196] sm:$0xff]
      %v206 = vld [vmem:[%s196 + $0x8] sm:$0xff]
      %v207 = vld [vmem:[%s1] sm:$0xff]
      %209 = vset.pattern.permute.xlu0 0
      %210 = vperm.xlu0 %209, %v207
      %v211 = vpop.permute.xlu0 %210
      %v213 = vmul.f32 %v205, %v211
      %v214 = vmul.f32 %v206, %v211
      %v215 = vld [vmem:[%s2] sm:$0xff]
      %217 = vset.pattern.permute.xlu0 0
      %218 = vperm.xlu0 %217, %v215
      %v219 = vpop.permute.xlu0 %218
      %v221 = vadd.f32 %v213, %v219
      %v222 = vadd.f32 %v214, %v219
      %v223 = vmax.f32 %v221, 0.0
      %v224 = vmax.f32 %v222, 0.0
      %225 = vmatpush.xpose.msra.mxu0 0.0
      %226 = vmatpush.xpose.msra.mxu0 0.0
      %227 = vmatpush.xpose.msra.mxu0 0.0
      %228 = vmatpush.xpose.msra.mxu0 0.0
      %229 = vmatpush.xpose.msra.mxu0 0.0
      %230 = vmatpush.xpose.msra.mxu0 0.0
      %231 = vmatpush.xpose.msra.mxu0 0.0
      %232 = vmatpush.xpose.msra.mxu0 0.0
      %233 = vmatpush.xpose.msra.mxu0 0.0
      %234 = vmatpush.xpose.msra.mxu0 0.0
      %235 = vmatpush.xpose.msra.mxu0 0.0
      %236 = vmatpush.xpose.msra.mxu0 0.0
      %237 = vmatpush.xpose.msra.mxu0 0.0
      %238 = vmatpush.xpose.msra.mxu0 0.0
      %239 = vmatpush.xpose.msra.mxu0 0.0
      %240 = vmatpush.xpose.msra.mxu0 %v223
      %241 = vmatmul.f32.gmra.mxu0 %v223
      %v242 = vpop.f32.mrf.mxu0
      %v243 = vadd.f32 0.0, %v242
      %244 = vdwg.mxu0
      %245 = vmatpush.xpose.msra.mxu0 0.0
      %246 = vmatpush.xpose.msra.mxu0 0.0
      %247 = vmatpush.xpose.msra.mxu0 0.0
      %248 = vmatpush.xpose.msra.mxu0 0.0
      %249 = vmatpush.xpose.msra.mxu0 0.0
      %250 = vmatpush.xpose.msra.mxu0 0.0
      %251 = vmatpush.xpose.msra.mxu0 0.0
      %252 = vmatpush.xpose.msra.mxu0 0.0
      %253 = vmatpush.xpose.msra.mxu0 0.0
      %254 = vmatpush.xpose.msra.mxu0 0.0
      %255 = vmatpush.xpose.msra.mxu0 0.0
      %256 = vmatpush.xpose.msra.mxu0 0.0
      %257 = vmatpush.xpose.msra.mxu0 0.0
      %258 = vmatpush.xpose.msra.mxu0 0.0
      %259 = vmatpush.xpose.msra.mxu0 0.0
      %260 = vmatpush.xpose.msra.mxu0 %v224
      %261 = vmatmul.f32.gmra.mxu0 %v224
      %v262 = vpop.f32.mrf.mxu0
      %v263 = vadd.f32 %v243, %v262
      %264 = vdwg.mxu0
      %v265 = vadd.f32 %v223, %v224
      %266 = vadd.xlane.f32.xlu0 %v265
      %v267 = vpop.xlane.xlu0 %266
      %269 = vrot.lane.b32.xlu0 %v263, 1
      %v270 = vpop.permute.xlu0 %269
      %vm272 = vcmask 7168
      %v273 = vsel %vm272, %v267, %v270
      %vm274 = vcmask 72704
      %275 = vst.msk [vmem:[%s204] sm:$0xff] %vm274, %v273
      %p276 = scmp.lt.s32.totalorder %s18, 1
      %s277 = scalar_select %p276, %s18, 1
      %p278 = scmp.lt.s32.totalorder %s19, 0
      %s279 = scalar_select %p278, %s19, 0
      %s280 = sadd.s32 %s279, %s277
      %s281 = smul.addr %s280, 8
      %s282 = scalar_lea.vmem %s3, %s281
      // Predicated region
      $region33: #{local_attention_forward.4} parent=31 // pred_check
        %p283 = pneg %p116
      $region34: #{local_attention_forward.4} parent=31 // pred_check_branch
        %285 = sbr.rel (%p283) target = $region36
      $region35: #{local_attention_forward.4} parent=31 // pred_region
        _
      $region36: #{local_attention_forward.4} parent=31 // pred_fallthru
        _
    $region32: #{local_attention_forward.4} parent=5 // pred_fallthru
      _
    %p286 = scmp.le.s32.totalorder 2, %s9
    // Predicated region
    $region37: #{local_attention_forward.4} parent=5 // pred_check
      %p287 = pneg %p286
    $region38: #{local_attention_forward.4} parent=5 // pred_check_branch
      %289 = sbr.rel (%p287) target = $region40
    $region39: #{local_attention_forward.4} parent=5 // pred_region
      %s290 = ssub.s32 %s9, 2
      // Predicated region
      $region41: #{local_attention_forward.4} parent=39 // pred_check
        %p291 = pneg %p122
      $region42: #{local_attention_forward.4} parent=39 // pred_check_branch
        %293 = sbr.rel (%p291) target = $region44
      $region43: #{local_attention_forward.4} parent=39 // pred_region
        %p294 = scmp.lt.s32.totalorder %s20, 1
        %s295 = scalar_select %p294, %s20, 1
        %p296 = scmp.lt.s32.totalorder %s21, 0
        %s297 = scalar_select %p296, %s21, 0
        %s298 = sadd.s32 %s297, %s295
        %s299 = smul.addr %s298, 8
        %s300 = scalar_lea.vmem %s3, %s299
      $region44: #{local_attention_forward.4} parent=39 // pred_fallthru
        _
    $region40: #{local_attention_forward.4} parent=5 // pred_fallthru
      _
  $region6: #{local_attention_forward.4} parent=0 // loop_footer
    %s13 = sadd.s32 1, %s9
  $region7: #{local_attention_forward.4} parent=0 // loop_footer_branch
    %8 = sbr.rel target = $region3
  $region8: #{local_attention_forward.4} parent=0 // loop_exit
    _

// kernel: local_attention_forward.5
$region0: #{local_attention_forward.5}
  #allocation0 [shape = 'u32[]', space=smem, size = 0x4, offset = 0x4, fixed_abs, tag = 'smem constant byte address 0x4 - core index']
  #allocation1 [shape = 'u32[72,128]{1,0:T(1,128)}', space=vmem, size = 0x9000, scoped, tag = 'internal scratch']
  %s0 = inlined_call_operand.vmem [shape: f32[2,8,256], index: 0, kind: input, shape index: {}]
  %s1 = inlined_call_operand.vmem [shape: f32[8,1], index: 1, kind: input, shape index: {}]
  %s2 = inlined_call_operand.vmem [shape: f32[8,1], index: 2, kind: input, shape index: {}]
  %s3 = inlined_call_operand.vmem [shape: f32[128,8], index: 3, kind: input, shape index: {}]
  %s4 = inlined_call_operand.vmem [shape: f32[128,1], index: 4, kind: input, shape index: {}]
  %s5 = inlined_call_operand.vmem [shape: f32[128,1], index: 5, kind: input, shape index: {}]
  %s6 = inlined_call_operand.vmem [shape: f32[2,128,256], index: 6, kind: output, shape index: {}]
  %s7 = sld [smem:[#allocation0]]
  $region57: #{local_attention_forward.5} parent=0
    _
  %s9 = ssub.s32 1, %s7
  %s10 = scalar_select 0, %s9, %s7
  loop: start=0, step=1, limit=4
  $region2: #{local_attention_forward.5} parent=0 // loop_pre_header
    _
  $region3: #{local_attention_forward.5} parent=0 // loop_header
    %s12 = sphi 0, %s16
    %p13 = scmp.ge.s32.totalorder %s12, 4
    %s19 = sphi 0, %s31
    %s20 = sphi 0, %s27
    %s21 = sphi 0, %s19
    %s22 = sphi 0, %s20
    %s23 = sphi 0, %s21
    %s24 = sphi 0, %s22
    %s36 = sphi 0, %s38
    %s39 = sphi 0, %s36
    %s40 = sphi 0, %s39
    %s56 = sphi 0, %s40
    %s60 = sphi 0, %s60
    %s62 = sphi 0, %s60
    %s63 = sphi 0, %s62
    %s77 = sphi 0, %s63
    %s81 = sphi 0, %s81
    %s83 = sphi 0, %s81
    %s84 = sphi 0, %s83
    %s98 = sphi 0, %s84
    %s102 = sphi 0, %s102
    %s104 = sphi 0, %s102
    %s105 = sphi 0, %s104
    %s119 = sphi 0, %s105
    %s123 = sphi 0, %s123
    %s125 = sphi 0, %s123
    %s126 = sphi 0, %s125
    %s140 = sphi 0, %s126
    %s144 = sphi 0, %s144
    %s146 = sphi 0, %s144
    %s147 = sphi 0, %s146
    %s161 = sphi 0, %s147
    %s169 = sphi 0, %s171
    %s172 = sphi 0, %s169
    %s173 = sphi 0, %s172
    %s189 = sphi 0, %s173
  $region4: #{local_attention_forward.5} parent=0 // loop_header_branch
    %15 = sbr.rel (%p13) target = $region8
  $region5: #{local_attention_forward.5} parent=0 // loop_body
    %s17 = ssub.s32 %s12, 1
    %s18 = ssub.s32 %s12, 2
    %s25 = sadd.s32 1, %s20
    %p26 = scmp.ge.s32.totalorder %s25, 1
    %s27 = scalar_select %p26, 0, %s25
    %s28 = sadd.s32 1, %s19
    %s29 = scalar_select %p26, %s28, %s19
    %p30 = scmp.ge.s32.totalorder %s29, 2
    %s31 = scalar_select %p30, 0, %s29
    %s32 = ssub.s32 %s19, %s31
    %s33 = ssub.s32 %s20, %s27
    %s34 = sor.u32 %s32, %s33
    %p35 = scmp.eq.s32.totalorder %s34, 0
    %s37 = sadd.s32 %s36, 1
    %s38 = scalar_select %p35, %s36, %s37
    %p41 = pneg %p35
    %p42 = scmp.eq.s32.totalorder %s12, 1
    %p43 = por %p41, %p42
    %p44 = scmp.ne.s32.totalorder %s36, %s39
    %p45 = scmp.eq.s32.totalorder %s12, 0
    %p46 = por %p44, %p45
    %p47 = scmp.ne.s32.totalorder %s36, %s39
    %p48 = scmp.eq.s32.totalorder %s17, 1
    %p49 = por %p47, %p48
    %p50 = scmp.ne.s32.totalorder %s39, %s40
    %p51 = scmp.eq.s32.totalorder %s17, 0
    %p52 = por %p50, %p51
    %p53 = scmp.ne.s32.totalorder %s39, %s40
    %p54 = scmp.eq.s32.totalorder %s18, 1
    %p55 = por %p53, %p54
    %p57 = scmp.ne.s32.totalorder %s40, %s56
    %p58 = scmp.eq.s32.totalorder %s18, 0
    %p59 = por %p57, %p58
    %s61 = sadd.s32 %s60, 1
    %p64 = scmp.eq.s32.totalorder %s12, 1
    %p65 = scmp.ne.s32.totalorder %s60, %s62
    %p66 = scmp.eq.s32.totalorder %s12, 0
    %p67 = por %p65, %p66
    %p68 = scmp.ne.s32.totalorder %s60, %s62
    %p69 = scmp.eq.s32.totalorder %s17, 1
    %p70 = por %p68, %p69
    %p71 = scmp.ne.s32.totalorder %s62, %s63
    %p72 = scmp.eq.s32.totalorder %s17, 0
    %p73 = por %p71, %p72
    %p74 = scmp.ne.s32.totalorder %s62, %s63
    %p75 = scmp.eq.s32.totalorder %s18, 1
    %p76 = por %p74, %p75
    %p78 = scmp.ne.s32.totalorder %s63, %s77
    %p79 = scmp.eq.s32.totalorder %s18, 0
    %p80 = por %p78, %p79
    %s82 = sadd.s32 %s81, 1
    %p85 = scmp.eq.s32.totalorder %s12, 1
    %p86 = scmp.ne.s32.totalorder %s81, %s83
    %p87 = scmp.eq.s32.totalorder %s12, 0
    %p88 = por %p86, %p87
    %p89 = scmp.ne.s32.totalorder %s81, %s83
    %p90 = scmp.eq.s32.totalorder %s17, 1
    %p91 = por %p89, %p90
    %p92 = scmp.ne.s32.totalorder %s83, %s84
    %p93 = scmp.eq.s32.totalorder %s17, 0
    %p94 = por %p92, %p93
    %p95 = scmp.ne.s32.totalorder %s83, %s84
    %p96 = scmp.eq.s32.totalorder %s18, 1
    %p97 = por %p95, %p96
    %p99 = scmp.ne.s32.totalorder %s84, %s98
    %p100 = scmp.eq.s32.totalorder %s18, 0
    %p101 = por %p99, %p100
    %s103 = sadd.s32 %s102, 1
    %p106 = scmp.eq.s32.totalorder %s12, 1
    %p107 = scmp.ne.s32.totalorder %s102, %s104
    %p108 = scmp.eq.s32.totalorder %s12, 0
    %p109 = por %p107, %p108
    %p110 = scmp.ne.s32.totalorder %s102, %s104
    %p111 = scmp.eq.s32.totalorder %s17, 1
    %p112 = por %p110, %p111
    %p113 = scmp.ne.s32.totalorder %s104, %s105
    %p114 = scmp.eq.s32.totalorder %s17, 0
    %p115 = por %p113, %p114
    %p116 = scmp.ne.s32.totalorder %s104, %s105
    %p117 = scmp.eq.s32.totalorder %s18, 1
    %p118 = por %p116, %p117
    %p120 = scmp.ne.s32.totalorder %s105, %s119
    %p121 = scmp.eq.s32.totalorder %s18, 0
    %p122 = por %p120, %p121
    %s124 = sadd.s32 %s123, 1
    %p127 = scmp.eq.s32.totalorder %s12, 1
    %p128 = scmp.ne.s32.totalorder %s123, %s125
    %p129 = scmp.eq.s32.totalorder %s12, 0
    %p130 = por %p128, %p129
    %p131 = scmp.ne.s32.totalorder %s123, %s125
    %p132 = scmp.eq.s32.totalorder %s17, 1
    %p133 = por %p131, %p132
    %p134 = scmp.ne.s32.totalorder %s125, %s126
    %p135 = scmp.eq.s32.totalorder %s17, 0
    %p136 = por %p134, %p135
    %p137 = scmp.ne.s32.totalorder %s125, %s126
    %p138 = scmp.eq.s32.totalorder %s18, 1
    %p139 = por %p137, %p138
    %p141 = scmp.ne.s32.totalorder %s126, %s140
    %p142 = scmp.eq.s32.totalorder %s18, 0
    %p143 = por %p141, %p142
    %s145 = sadd.s32 %s144, 1
    %p148 = scmp.eq.s32.totalorder %s12, 1
    %p149 = scmp.ne.s32.totalorder %s144, %s146
    %p150 = scmp.eq.s32.totalorder %s12, 0
    %p151 = por %p149, %p150
    %p152 = scmp.ne.s32.totalorder %s144, %s146
    %p153 = scmp.eq.s32.totalorder %s17, 1
    %p154 = por %p152, %p153
    %p155 = scmp.ne.s32.totalorder %s146, %s147
    %p156 = scmp.eq.s32.totalorder %s17, 0
    %p157 = por %p155, %p156
    %p158 = scmp.ne.s32.totalorder %s146, %s147
    %p159 = scmp.eq.s32.totalorder %s18, 1
    %p160 = por %p158, %p159
    %p162 = scmp.ne.s32.totalorder %s147, %s161
    %p163 = scmp.eq.s32.totalorder %s18, 0
    %p164 = por %p162, %p163
    %s165 = ssub.s32 %s19, %s31
    %s166 = ssub.s32 %s20, %s27
    %s167 = sor.u32 %s165, %s166
    %p168 = scmp.eq.s32.totalorder %s167, 0
    %s170 = sadd.s32 %s169, 1
    %s171 = scalar_select %p168, %s169, %s170
    %p174 = pneg %p168
    %p175 = scmp.eq.s32.totalorder %s12, 1
    %p176 = por %p174, %p175
    %p177 = scmp.ne.s32.totalorder %s169, %s172
    %p178 = scmp.eq.s32.totalorder %s12, 0
    %p179 = por %p177, %p178
    %p180 = scmp.ne.s32.totalorder %s169, %s172
    %p181 = scmp.eq.s32.totalorder %s17, 1
    %p182 = por %p180, %p181
    %p183 = scmp.ne.s32.totalorder %s172, %s173
    %p184 = scmp.eq.s32.totalorder %s17, 0
    %p185 = por %p183, %p184
    %p186 = scmp.ne.s32.totalorder %s172, %s173
    %p187 = scmp.eq.s32.totalorder %s18, 1
    %p188 = por %p186, %p187
    %p190 = scmp.ne.s32.totalorder %s173, %s189
    %p191 = scmp.eq.s32.totalorder %s18, 0
    %p192 = por %p190, %p191
    %p193 = scmp.le.s32.totalorder 1, %s12
    %p194 = scmp.lt.s32.totalorder %s12, 3
    %p195 = pnand %p193, %p194
    %p196 = pneg %p195
    // Predicated region
    $region9: #{local_attention_forward.5} parent=5 // pred_check
      _
    $region10: #{local_attention_forward.5} parent=5 // pred_check_branch
      %198 = sbr.rel (%p195) target = $region12
    $region11: #{local_attention_forward.5} parent=5 // pred_region
      %s199 = ssub.s32 %s12, 1
      // Predicated region
      $region13: #{local_attention_forward.5} parent=11 // pred_check
        %p200 = pneg %p73
      $region14: #{local_attention_forward.5} parent=11 // pred_check_branch
        %202 = sbr.rel (%p200) target = $region16
      $region15: #{local_attention_forward.5} parent=11 // pred_region
        _
      $region16: #{local_attention_forward.5} parent=11 // pred_fallthru
        _
      // Predicated region
      $region17: #{local_attention_forward.5} parent=11 // pred_check
        %p203 = pneg %p94
      $region18: #{local_attention_forward.5} parent=11 // pred_check_branch
        %205 = sbr.rel (%p203) target = $region20
      $region19: #{local_attention_forward.5} parent=11 // pred_region
        _
      $region20: #{local_attention_forward.5} parent=11 // pred_fallthru
        _
      // Predicated region
      $region21: #{local_attention_forward.5} parent=11 // pred_check
        %p206 = pneg %p115
      $region22: #{local_attention_forward.5} parent=11 // pred_check_branch
        %208 = sbr.rel (%p206) target = $region24
      $region23: #{local_attention_forward.5} parent=11 // pred_region
        _
      $region24: #{local_attention_forward.5} parent=11 // pred_fallthru
        _
      // Predicated region
      $region25: #{local_attention_forward.5} parent=11 // pred_check
        %p209 = pneg %p136
      $region26: #{local_attention_forward.5} parent=11 // pred_check_branch
        %211 = sbr.rel (%p209) target = $region28
      $region27: #{local_attention_forward.5} parent=11 // pred_region
        _
      $region28: #{local_attention_forward.5} parent=11 // pred_fallthru
        _
      // Predicated region
      $region29: #{local_attention_forward.5} parent=11 // pred_check
        %p212 = pneg %p157
      $region30: #{local_attention_forward.5} parent=11 // pred_check_branch
        %214 = sbr.rel (%p212) target = $region32
      $region31: #{local_attention_forward.5} parent=11 // pred_region
        _
      $region32: #{local_attention_forward.5} parent=11 // pred_fallthru
        _
    $region12: #{local_attention_forward.5} parent=5 // pred_fallthru
      _
    %p215 = scmp.lt.s32.totalorder %s12, 2
    // Predicated region
    $region33: #{local_attention_forward.5} parent=5 // pred_check
      %p216 = pneg %p215
    $region34: #{local_attention_forward.5} parent=5 // pred_check_branch
      %218 = sbr.rel (%p216) target = $region36
    $region35: #{local_attention_forward.5} parent=5 // pred_region
      // Predicated region
      $region37: #{local_attention_forward.5} parent=35 // pred_check
        %p219 = pneg %p46
      $region38: #{local_attention_forward.5} parent=35 // pred_check_branch
        %221 = sbr.rel (%p219) target = $region40
      $region39: #{local_attention_forward.5} parent=35 // pred_region
        %s222 = smul.u32 2, %s20
        %p223 = scmp.lt.s32.totalorder %s19, 1
        %s224 = scalar_select %p223, %s19, 1
        %p225 = scmp.lt.s32.totalorder %s222, 1
        %s226 = scalar_select %p225, %s222, 1
        %s227 = smul.addr %s224, 2
        %s228 = sadd.s32 %s226, %s227
        %s229 = smul.addr %s228, 8
        %s230 = scalar_lea.vmem %s0, %s229
        %s231 = smul.u32 2, %s20
      $region40: #{local_attention_forward.5} parent=35 // pred_fallthru
        _
    $region36: #{local_attention_forward.5} parent=5 // pred_fallthru
      _
    %p232 = scmp.le.s32.totalorder 1, %s12
    %p233 = scmp.lt.s32.totalorder %s12, 3
    %p234 = pnand %p232, %p233
    %p235 = pneg %p234
    // Predicated region
    $region41: #{local_attention_forward.5} parent=5 // pred_check
      _
    $region42: #{local_attention_forward.5} parent=5 // pred_check_branch
      %237 = sbr.rel (%p234) target = $region44
    $region43: #{local_attention_forward.5} parent=5 // pred_region
      %s238 = ssub.s32 %s12, 1
      %s239 = smul.u32 2, %s22
      %p240 = scmp.lt.s32.totalorder %s21, 1
      %s241 = scalar_select %p240, %s21, 1
      %p242 = scmp.lt.s32.totalorder %s239, 1
      %s243 = scalar_select %p242, %s239, 1
      %s244 = smul.addr %s241, 2
      %s245 = sadd.s32 %s243, %s244
      %s246 = smul.addr %s245, 8
      %s247 = scalar_lea.vmem %s0, %s246
      %p248 = pneg %p52
      %p249 = pneg %p49
      %p250 = pneg %p73
      %p251 = pneg %p70
      %p252 = pneg %p94
      %p253 = pneg %p91
      %p254 = pneg %p115
      %p255 = pneg %p112
      %p256 = pneg %p136
      %p257 = pneg %p133
      %p258 = pneg %p157
      %p259 = pneg %p154
      %p260 = pneg %p185
      %p261 = pneg %p182
      %s262 = smul.u32 2, %s22
      %p263 = scmp.lt.s32.totalorder %s21, 1
      %s264 = scalar_select %p263, %s21, 1
      %p265 = scmp.lt.s32.totalorder %s262, 1
      %s266 = scalar_select %p265, %s262, 1
      %s267 = smul.addr %s264, 32
      %s268 = sadd.s32 %s266, %s267
      %s269 = smul.addr %s268, 8
      %s270 = scalar_lea.vmem %s6, %s269
      %s271 = smul.u32 2, %s22
      %p272 = scmp.lt.s32.totalorder %s21, 1
      %s273 = scalar_select %p272, %s21, 1
      %p274 = scmp.lt.s32.totalorder %s271, 1
      %s275 = scalar_select %p274, %s271, 1
      %s276 = smul.addr %s273, 2
      %s277 = sadd.s32 %s275, %s276
      %s278 = smul.addr %s277, 8
      %s279 = scalar_lea.vmem %s0, %s278
      %s280 = smul.u32 2, %s22
      %s281 = smul.u32 2, %s22
      %p282 = scmp.lt.s32.totalorder %s21, 1
      %s283 = scalar_select %p282, %s21, 1
      %p284 = scmp.lt.s32.totalorder %s281, 1
      %s285 = scalar_select %p284, %s281, 1
      %s286 = smul.addr %s283, 32
      %s287 = sadd.s32 %s285, %s286
      %s288 = smul.addr %s287, 8
      %s289 = scalar_lea.vmem %s6, %s288
      %s290 = smul.u32 2, %s22
      %v291 = vld [vmem:[%s279] sm:$0xff]
      %v292 = vld [vmem:[%s279 + $0x8] sm:$0xff]
      %v293 = vld [vmem:[%s1] sm:$0xff]
      %295 = vset.pattern.permute.xlu0 0
      %296 = vperm.xlu0 %295, %v293
      %v297 = vpop.permute.xlu0 %296
      %v299 = vmul.f32 %v291, %v297
      %v300 = vmul.f32 %v292, %v297
      %v301 = vld [vmem:[%s2] sm:$0xff]
      %303 = vset.pattern.permute.xlu0 0
      %304 = vperm.xlu0 %303, %v301
      %v305 = vpop.permute.xlu0 %304
      %v307 = vadd.f32 %v299, %v305
      %v308 = vadd.f32 %v300, %v305
      %v309 = vmax.f32 %v307, 0.0
      %v310 = vmax.f32 %v308, 0.0
      %v311 = vld [vmem:[%s3] sm:$0xff]
      %v312 = vld [vmem:[%s3 + $0x8] sm:$0xff]
      %v313 = vld [vmem:[%s3 + $0x10] sm:$0xff]
      %v314 = vld [vmem:[%s3 + $0x18] sm:$0xff]
      %v315 = vld [vmem:[%s3 + $0x20] sm:$0xff]
      %v316 = vld [vmem:[%s3 + $0x28] sm:$0xff]
      %v317 = vld [vmem:[%s3 + $0x30] sm:$0xff]
      %v318 = vld [vmem:[%s3 + $0x38] sm:$0xff]
      %v319 = vld [vmem:[%s3 + $0x40] sm:$0xff]
      %v320 = vld [vmem:[%s3 + $0x48] sm:$0xff]
      %v321 = vld [vmem:[%s3 + $0x50] sm:$0xff]
      %v322 = vld [vmem:[%s3 + $0x58] sm:$0xff]
      %v323 = vld [vmem:[%s3 + $0x60] sm:$0xff]
      %v324 = vld [vmem:[%s3 + $0x68] sm:$0xff]
      %v325 = vld [vmem:[%s3 + $0x70] sm:$0xff]
      %v326 = vld [vmem:[%s3 + $0x78] sm:$0xff]
      %vm327 = vcmask 64512
      %v329 = vsel %vm327, %v311, 0
      %v332 = vsel %vm327, %v312, 0
      %v335 = vsel %vm327, %v313, 0
      %v338 = vsel %vm327, %v314, 0
      %v341 = vsel %vm327, %v315, 0
      %v344 = vsel %vm327, %v316, 0
      %v347 = vsel %vm327, %v317, 0
      %v350 = vsel %vm327, %v318, 0
      %v353 = vsel %vm327, %v319, 0
      %v356 = vsel %vm327, %v320, 0
      %v359 = vsel %vm327, %v321, 0
      %v362 = vsel %vm327, %v322, 0
      %v365 = vsel %vm327, %v323, 0
      %v368 = vsel %vm327, %v324, 0
      %v371 = vsel %vm327, %v325, 0
      %v374 = vsel %vm327, %v326, 0
      %376 = vmatpush.msra.mxu0 0.0
      %377 = vmatpush.msra.mxu0 0.0
      %378 = vmatpush.msra.mxu0 0.0
      %379 = vmatpush.msra.mxu0 0.0
      %380 = vmatpush.msra.mxu0 0.0
      %381 = vmatpush.msra.mxu0 0.0
      %382 = vmatpush.msra.mxu0 0.0
      %383 = vmatpush.msra.mxu0 0.0
      %384 = vmatpush.msra.mxu0 0.0
      %385 = vmatpush.msra.mxu0 0.0
      %386 = vmatpush.msra.mxu0 0.0
      %387 = vmatpush.msra.mxu0 0.0
      %388 = vmatpush.msra.mxu0 0.0
      %389 = vmatpush.msra.mxu0 0.0
      %390 = vmatpush.msra.mxu0 0.0
      %391 = vmatpush.msra.mxu0 %v309
      %392 = vmatmul.f32.gmra.mxu0 %v329
      %v393 = vpop.f32.mrf.mxu0
      %v394 = vadd.f32 0.0, %v393
      %395 = vmatmul.f32.gmra.mxu0 %v332
      %v396 = vpop.f32.mrf.mxu0
      %v397 = vadd.f32 0.0, %v396
      %398 = vmatmul.f32.gmra.mxu0 %v335
      %v399 = vpop.f32.mrf.mxu0
      %v400 = vadd.f32 0.0, %v399
      %401 = vmatmul.f32.gmra.mxu0 %v338
      %v402 = vpop.f32.mrf.mxu0
      %v403 = vadd.f32 0.0, %v402
      %404 = vmatmul.f32.gmra.mxu0 %v341
      %v405 = vpop.f32.mrf.mxu0
      %v406 = vadd.f32 0.0, %v405
      %407 = vmatmul.f32.gmra.mxu0 %v344
      %v408 = vpop.f32.mrf.mxu0
      %v409 = vadd.f32 0.0, %v408
      %410 = vmatmul.f32.gmra.mxu0 %v347
      %v411 = vpop.f32.mrf.mxu0
      %v412 = vadd.f32 0.0, %v411
      %413 = vmatmul.f32.gmra.mxu0 %v350
      %v414 = vpop.f32.mrf.mxu0
      %v415 = vadd.f32 0.0, %v414
      %416 = vmatmul.f32.gmra.mxu0 %v353
      %v417 = vpop.f32.mrf.mxu0
      %v418 = vadd.f32 0.0, %v417
      %419 = vmatmul.f32.gmra.mxu0 %v356
      %v420 = vpop.f32.mrf.mxu0
      %v421 = vadd.f32 0.0, %v420
      %422 = vmatmul.f32.gmra.mxu0 %v359
      %v423 = vpop.f32.mrf.mxu0
      %v424 = vadd.f32 0.0, %v423
      %425 = vmatmul.f32.gmra.mxu0 %v362
      %v426 = vpop.f32.mrf.mxu0
      %v427 = vadd.f32 0.0, %v426
      %428 = vmatmul.f32.gmra.mxu0 %v365
      %v429 = vpop.f32.mrf.mxu0
      %v430 = vadd.f32 0.0, %v429
      %431 = vmatmul.f32.gmra.mxu0 %v368
      %v432 = vpop.f32.mrf.mxu0
      %v433 = vadd.f32 0.0, %v432
      %434 = vmatmul.f32.gmra.mxu0 %v371
      %v435 = vpop.f32.mrf.mxu0
      %v436 = vadd.f32 0.0, %v435
      %437 = vmatmul.f32.gmra.mxu0 %v374
      %v438 = vpop.f32.mrf.mxu0
      %v439 = vadd.f32 0.0, %v438
      %440 = vdwg.mxu0
      %441 = vmatpush.msra.mxu0 0.0
      %442 = vmatpush.msra.mxu0 0.0
      %443 = vmatpush.msra.mxu0 0.0
      %444 = vmatpush.msra.mxu0 0.0
      %445 = vmatpush.msra.mxu0 0.0
      %446 = vmatpush.msra.mxu0 0.0
      %447 = vmatpush.msra.mxu0 0.0
      %448 = vmatpush.msra.mxu0 0.0
      %449 = vmatpush.msra.mxu0 0.0
      %450 = vmatpush.msra.mxu0 0.0
      %451 = vmatpush.msra.mxu0 0.0
      %452 = vmatpush.msra.mxu0 0.0
      %453 = vmatpush.msra.mxu0 0.0
      %454 = vmatpush.msra.mxu0 0.0
      %455 = vmatpush.msra.mxu0 0.0
      %456 = vmatpush.msra.mxu0 %v310
      %457 = vmatmul.f32.gmra.mxu0 %v329
      %v458 = vpop.f32.mrf.mxu0
      %v459 = vadd.f32 0.0, %v458
      %460 = vmatmul.f32.gmra.mxu0 %v332
      %v461 = vpop.f32.mrf.mxu0
      %v462 = vadd.f32 0.0, %v461
      %463 = vmatmul.f32.gmra.mxu0 %v335
      %v464 = vpop.f32.mrf.mxu0
      %v465 = vadd.f32 0.0, %v464
      %466 = vmatmul.f32.gmra.mxu0 %v338
      %v467 = vpop.f32.mrf.mxu0
      %v468 = vadd.f32 0.0, %v467
      %469 = vmatmul.f32.gmra.mxu0 %v341
      %v470 = vpop.f32.mrf.mxu0
      %v471 = vadd.f32 0.0, %v470
      %472 = vmatmul.f32.gmra.mxu0 %v344
      %v473 = vpop.f32.mrf.mxu0
      %v474 = vadd.f32 0.0, %v473
      %475 = vmatmul.f32.gmra.mxu0 %v347
      %v476 = vpop.f32.mrf.mxu0
      %v477 = vadd.f32 0.0, %v476
      %478 = vmatmul.f32.gmra.mxu0 %v350
      %v479 = vpop.f32.mrf.mxu0
      %v480 = vadd.f32 0.0, %v479
      %481 = vmatmul.f32.gmra.mxu0 %v353
      %v482 = vpop.f32.mrf.mxu0
      %v483 = vadd.f32 0.0, %v482
      %484 = vmatmul.f32.gmra.mxu0 %v356
      %v485 = vpop.f32.mrf.mxu0
      %v486 = vadd.f32 0.0, %v485
      %487 = vmatmul.f32.gmra.mxu0 %v359
      %v488 = vpop.f32.mrf.mxu0
      %v489 = vadd.f32 0.0, %v488
      %490 = vmatmul.f32.gmra.mxu0 %v362
      %v491 = vpop.f32.mrf.mxu0
      %v492 = vadd.f32 0.0, %v491
      %493 = vmatmul.f32.gmra.mxu0 %v365
      %v494 = vpop.f32.mrf.mxu0
      %v495 = vadd.f32 0.0, %v494
      %496 = vmatmul.f32.gmra.mxu0 %v368
      %v497 = vpop.f32.mrf.mxu0
      %v498 = vadd.f32 0.0, %v497
      %499 = vmatmul.f32.gmra.mxu0 %v371
      %v500 = vpop.f32.mrf.mxu0
      %v501 = vadd.f32 0.0, %v500
      %502 = vmatmul.f32.gmra.mxu0 %v374
      %v503 = vpop.f32.mrf.mxu0
      %v504 = vadd.f32 0.0, %v503
      %505 = vdwg.mxu0
      %v506 = vld [vmem:[%s4] sm:$0xff]
      %v507 = vld [vmem:[%s4 + $0x8] sm:$0xff]
      %v508 = vld [vmem:[%s4 + $0x10] sm:$0xff]
      %v509 = vld [vmem:[%s4 + $0x18] sm:$0xff]
      %v510 = vld [vmem:[%s4 + $0x20] sm:$0xff]
      %v511 = vld [vmem:[%s4 + $0x28] sm:$0xff]
      %v512 = vld [vmem:[%s4 + $0x30] sm:$0xff]
      %v513 = vld [vmem:[%s4 + $0x38] sm:$0xff]
      %v514 = vld [vmem:[%s4 + $0x40] sm:$0xff]
      %v515 = vld [vmem:[%s4 + $0x48] sm:$0xff]
      %v516 = vld [vmem:[%s4 + $0x50] sm:$0xff]
      %v517 = vld [vmem:[%s4 + $0x58] sm:$0xff]
      %v518 = vld [vmem:[%s4 + $0x60] sm:$0xff]
      %v519 = vld [vmem:[%s4 + $0x68] sm:$0xff]
      %v520 = vld [vmem:[%s4 + $0x70] sm:$0xff]
      %v521 = vld [vmem:[%s4 + $0x78] sm:$0xff]
      %523 = vset.pattern.permute.xlu0 0
      %524 = vperm.xlu0 %523, %v506
      %v525 = vpop.permute.xlu0 %524
      %528 = vset.pattern.permute.xlu0 0
      %529 = vperm.xlu0 %528, %v507
      %v530 = vpop.permute.xlu0 %529
      %533 = vset.pattern.permute.xlu0 0
      %534 = vperm.xlu0 %533, %v508
      %v535 = vpop.permute.xlu0 %534
      %538 = vset.pattern.permute.xlu0 0
      %539 = vperm.xlu0 %538, %v509
      %v540 = vpop.permute.xlu0 %539
      %543 = vset.pattern.permute.xlu0 0
      %544 = vperm.xlu0 %543, %v510
      %v545 = vpop.permute.xlu0 %544
      %548 = vset.pattern.permute.xlu0 0
      %549 = vperm.xlu0 %548, %v511
      %v550 = vpop.permute.xlu0 %549
      %553 = vset.pattern.permute.xlu0 0
      %554 = vperm.xlu0 %553, %v512
      %v555 = vpop.permute.xlu0 %554
      %558 = vset.pattern.permute.xlu0 0
      %559 = vperm.xlu0 %558, %v513
      %v560 = vpop.permute.xlu0 %559
      %563 = vset.pattern.permute.xlu0 0
      %564 = vperm.xlu0 %563, %v514
      %v565 = vpop.permute.xlu0 %564
      %568 = vset.pattern.permute.xlu0 0
      %569 = vperm.xlu0 %568, %v515
      %v570 = vpop.permute.xlu0 %569
      %573 = vset.pattern.permute.xlu0 0
      %574 = vperm.xlu0 %573, %v516
      %v575 = vpop.permute.xlu0 %574
      %578 = vset.pattern.permute.xlu0 0
      %579 = vperm.xlu0 %578, %v517
      %v580 = vpop.permute.xlu0 %579
      %583 = vset.pattern.permute.xlu0 0
      %584 = vperm.xlu0 %583, %v518
      %v585 = vpop.permute.xlu0 %584
      %588 = vset.pattern.permute.xlu0 0
      %589 = vperm.xlu0 %588, %v519
      %v590 = vpop.permute.xlu0 %589
      %593 = vset.pattern.permute.xlu0 0
      %594 = vperm.xlu0 %593, %v520
      %v595 = vpop.permute.xlu0 %594
      %598 = vset.pattern.permute.xlu0 0
      %599 = vperm.xlu0 %598, %v521
      %v600 = vpop.permute.xlu0 %599
      %v602 = vmul.f32 %v394, %v525
      %v603 = vmul.f32 %v459, %v525
      %v604 = vmul.f32 %v397, %v530
      %v605 = vmul.f32 %v462, %v530
      %v606 = vmul.f32 %v400, %v535
      %v607 = vmul.f32 %v465, %v535
      %v608 = vmul.f32 %v403, %v540
      %v609 = vmul.f32 %v468, %v540
      %v610 = vmul.f32 %v406, %v545
      %v611 = vmul.f32 %v471, %v545
      %v612 = vmul.f32 %v409, %v550
      %v613 = vmul.f32 %v474, %v550
      %v614 = vmul.f32 %v412, %v555
      %v615 = vmul.f32 %v477, %v555
      %v616 = vmul.f32 %v415, %v560
      %v617 = vmul.f32 %v480, %v560
      %v618 = vmul.f32 %v418, %v565
      %v619 = vmul.f32 %v483, %v565
      %v620 = vmul.f32 %v421, %v570
      %v621 = vmul.f32 %v486, %v570
      %v622 = vmul.f32 %v424, %v575
      %v623 = vmul.f32 %v489, %v575
      %v624 = vmul.f32 %v427, %v580
      %v625 = vmul.f32 %v492, %v580
      %v626 = vmul.f32 %v430, %v585
      %v627 = vmul.f32 %v495, %v585
      %v628 = vmul.f32 %v433, %v590
      %v629 = vmul.f32 %v498, %v590
      %v630 = vmul.f32 %v436, %v595
      %v631 = vmul.f32 %v501, %v595
      %v632 = vmul.f32 %v439, %v600
      %v633 = vmul.f32 %v504, %v600
      %v634 = vld [vmem:[%s5] sm:$0xff]
      %v635 = vld [vmem:[%s5 + $0x8] sm:$0xff]
      %v636 = vld [vmem:[%s5 + $0x10] sm:$0xff]
      %v637 = vld [vmem:[%s5 + $0x18] sm:$0xff]
      %v638 = vld [vmem:[%s5 + $0x20] sm:$0xff]
      %v639 = vld [vmem:[%s5 + $0x28] sm:$0xff]
      %v640 = vld [vmem:[%s5 + $0x30] sm:$0xff]
      %v641 = vld [vmem:[%s5 + $0x38] sm:$0xff]
      %v642 = vld [vmem:[%s5 + $0x40] sm:$0xff]
      %v643 = vld [vmem:[%s5 + $0x48] sm:$0xff]
      %v644 = vld [vmem:[%s5 + $0x50] sm:$0xff]
      %v645 = vld [vmem:[%s5 + $0x58] sm:$0xff]
      %v646 = vld [vmem:[%s5 + $0x60] sm:$0xff]
      %v647 = vld [vmem:[%s5 + $0x68] sm:$0xff]
      %v648 = vld [vmem:[%s5 + $0x70] sm:$0xff]
      %v649 = vld [vmem:[%s5 + $0x78] sm:$0xff]
      %651 = vset.pattern.permute.xlu0 0
      %652 = vperm.xlu0 %651, %v634
      %v653 = vpop.permute.xlu0 %652
      %656 = vset.pattern.permute.xlu0 0
      %657 = vperm.xlu0 %656, %v635
      %v658 = vpop.permute.xlu0 %657
      %661 = vset.pattern.permute.xlu0 0
      %662 = vperm.xlu0 %661, %v636
      %v663 = vpop.permute.xlu0 %662
      %666 = vset.pattern.permute.xlu0 0
      %667 = vperm.xlu0 %666, %v637
      %v668 = vpop.permute.xlu0 %667
      %671 = vset.pattern.permute.xlu0 0
      %672 = vperm.xlu0 %671, %v638
      %v673 = vpop.permute.xlu0 %672
      %676 = vset.pattern.permute.xlu0 0
      %677 = vperm.xlu0 %676, %v639
      %v678 = vpop.permute.xlu0 %677
      %681 = vset.pattern.permute.xlu0 0
      %682 = vperm.xlu0 %681, %v640
      %v683 = vpop.permute.xlu0 %682
      %686 = vset.pattern.permute.xlu0 0
      %687 = vperm.xlu0 %686, %v641
      %v688 = vpop.permute.xlu0 %687
      %691 = vset.pattern.permute.xlu0 0
      %692 = vperm.xlu0 %691, %v642
      %v693 = vpop.permute.xlu0 %692
      %696 = vset.pattern.permute.xlu0 0
      %697 = vperm.xlu0 %696, %v643
      %v698 = vpop.permute.xlu0 %697
      %701 = vset.pattern.permute.xlu0 0
      %702 = vperm.xlu0 %701, %v644
      %v703 = vpop.permute.xlu0 %702
      %706 = vset.pattern.permute.xlu0 0
      %707 = vperm.xlu0 %706, %v645
      %v708 = vpop.permute.xlu0 %707
      %711 = vset.pattern.permute.xlu0 0
      %712 = vperm.xlu0 %711, %v646
      %v713 = vpop.permute.xlu0 %712
      %716 = vset.pattern.permute.xlu0 0
      %717 = vperm.xlu0 %716, %v647
      %v718 = vpop.permute.xlu0 %717
      %721 = vset.pattern.permute.xlu0 0
      %722 = vperm.xlu0 %721, %v648
      %v723 = vpop.permute.xlu0 %722
      %726 = vset.pattern.permute.xlu0 0
      %727 = vperm.xlu0 %726, %v649
      %v728 = vpop.permute.xlu0 %727
      %v730 = vadd.f32 %v602, %v653
      %v731 = vadd.f32 %v603, %v653
      %v732 = vadd.f32 %v604, %v658
      %v733 = vadd.f32 %v605, %v658
      %v734 = vadd.f32 %v606, %v663
      %v735 = vadd.f32 %v607, %v663
      %v736 = vadd.f32 %v608, %v668
      %v737 = vadd.f32 %v609, %v668
      %v738 = vadd.f32 %v610, %v673
      %v739 = vadd.f32 %v611, %v673
      %v740 = vadd.f32 %v612, %v678
      %v741 = vadd.f32 %v613, %v678
      %v742 = vadd.f32 %v614, %v683
      %v743 = vadd.f32 %v615, %v683
      %v744 = vadd.f32 %v616, %v688
      %v745 = vadd.f32 %v617, %v688
      %v746 = vadd.f32 %v618, %v693
      %v747 = vadd.f32 %v619, %v693
      %v748 = vadd.f32 %v620, %v698
      %v749 = vadd.f32 %v621, %v698
      %v750 = vadd.f32 %v622, %v703
      %v751 = vadd.f32 %v623, %v703
      %v752 = vadd.f32 %v624, %v708
      %v753 = vadd.f32 %v625, %v708
      %v754 = vadd.f32 %v626, %v713
      %v755 = vadd.f32 %v627, %v713
      %v756 = vadd.f32 %v628, %v718
      %v757 = vadd.f32 %v629, %v718
      %v758 = vadd.f32 %v630, %v723
      %v759 = vadd.f32 %v631, %v723
      %v760 = vadd.f32 %v632, %v728
      %v761 = vadd.f32 %v633, %v728
      %762 = vst [vmem:[%s289] sm:$0xff] %v730
      %763 = vst [vmem:[%s289 + $0x8] sm:$0xff] %v731
      %764 = vst [vmem:[%s289 + $0x10] sm:$0xff] %v732
      %765 = vst [vmem:[%s289 + $0x18] sm:$0xff] %v733
      %766 = vst [vmem:[%s289 + $0x20] sm:$0xff] %v734
      %767 = vst [vmem:[%s289 + $0x28] sm:$0xff] %v735
      %768 = vst [vmem:[%s289 + $0x30] sm:$0xff] %v736
      %769 = vst [vmem:[%s289 + $0x38] sm:$0xff] %v737
      %770 = vst [vmem:[%s289 + $0x40] sm:$0xff] %v738
      %771 = vst [vmem:[%s289 + $0x48] sm:$0xff] %v739
      %772 = vst [vmem:[%s289 + $0x50] sm:$0xff] %v740
      %773 = vst [vmem:[%s289 + $0x58] sm:$0xff] %v741
      %774 = vst [vmem:[%s289 + $0x60] sm:$0xff] %v742
      %775 = vst [vmem:[%s289 + $0x68] sm:$0xff] %v743
      %776 = vst [vmem:[%s289 + $0x70] sm:$0xff] %v744
      %777 = vst [vmem:[%s289 + $0x78] sm:$0xff] %v745
      %778 = vst [vmem:[%s289 + $0x80] sm:$0xff] %v746
      %779 = vst [vmem:[%s289 + $0x88] sm:$0xff] %v747
      %780 = vst [vmem:[%s289 + $0x90] sm:$0xff] %v748
      %781 = vst [vmem:[%s289 + $0x98] sm:$0xff] %v749
      %782 = vst [vmem:[%s289 + $0xa0] sm:$0xff] %v750
      %783 = vst [vmem:[%s289 + $0xa8] sm:$0xff] %v751
      %784 = vst [vmem:[%s289 + $0xb0] sm:$0xff] %v752
      %785 = vst [vmem:[%s289 + $0xb8] sm:$0xff] %v753
      %786 = vst [vmem:[%s289 + $0xc0] sm:$0xff] %v754
      %787 = vst [vmem:[%s289 + $0xc8] sm:$0xff] %v755
      %788 = vst [vmem:[%s289 + $0xd0] sm:$0xff] %v756
      %789 = vst [vmem:[%s289 + $0xd8] sm:$0xff] %v757
      %790 = vst [vmem:[%s289 + $0xe0] sm:$0xff] %v758
      %791 = vst [vmem:[%s289 + $0xe8] sm:$0xff] %v759
      %792 = vst [vmem:[%s289 + $0xf0] sm:$0xff] %v760
      %793 = vst [vmem:[%s289 + $0xf8] sm:$0xff] %v761
      %s794 = smul.u32 2, %s22
      %p795 = scmp.lt.s32.totalorder %s21, 1
      %s796 = scalar_select %p795, %s21, 1
      %p797 = scmp.lt.s32.totalorder %s794, 1
      %s798 = scalar_select %p797, %s794, 1
      %s799 = smul.addr %s796, 32
      %s800 = sadd.s32 %s798, %s799
      %s801 = smul.addr %s800, 8
      %s802 = scalar_lea.vmem %s6, %s801
      // Predicated region
      $region45: #{local_attention_forward.5} parent=43 // pred_check
        %p803 = pneg %p182
      $region46: #{local_attention_forward.5} parent=43 // pred_check_branch
        %805 = sbr.rel (%p803) target = $region48
      $region47: #{local_attention_forward.5} parent=43 // pred_region
        %s806 = smul.u32 2, %s22
      $region48: #{local_attention_forward.5} parent=43 // pred_fallthru
        _
    $region44: #{local_attention_forward.5} parent=5 // pred_fallthru
      _
    %p807 = scmp.le.s32.totalorder 2, %s12
    // Predicated region
    $region49: #{local_attention_forward.5} parent=5 // pred_check
      %p808 = pneg %p807
    $region50: #{local_attention_forward.5} parent=5 // pred_check_branch
      %810 = sbr.rel (%p808) target = $region52
    $region51: #{local_attention_forward.5} parent=5 // pred_region
      %s811 = ssub.s32 %s12, 2
      // Predicated region
      $region53: #{local_attention_forward.5} parent=51 // pred_check
        %p812 = pneg %p188
      $region54: #{local_attention_forward.5} parent=51 // pred_check_branch
        %814 = sbr.rel (%p812) target = $region56
      $region55: #{local_attention_forward.5} parent=51 // pred_region
        %s815 = smul.u32 2, %s24
        %p816 = scmp.lt.s32.totalorder %s23, 1
        %s817 = scalar_select %p816, %s23, 1
        %p818 = scmp.lt.s32.totalorder %s815, 1
        %s819 = scalar_select %p818, %s815, 1
        %s820 = smul.addr %s817, 32
        %s821 = sadd.s32 %s819, %s820
        %s822 = smul.addr %s821, 8
        %s823 = scalar_lea.vmem %s6, %s822
      $region56: #{local_attention_forward.5} parent=51 // pred_fallthru
        _
    $region52: #{local_attention_forward.5} parent=5 // pred_fallthru
      _
  $region6: #{local_attention_forward.5} parent=0 // loop_footer
    %s16 = sadd.s32 1, %s12
  $region7: #{local_attention_forward.5} parent=0 // loop_footer_branch
    %11 = sbr.rel target = $region3
  $region8: #{local_attention_forward.5} parent=0 // loop_exit
    _

</llo_original>
